<compile_context>
chip_gen: v6e
topology: v6e:2x2x1
jax: 0.10.0
libtpu: 0.0.40
codegen_flags: <defaults>
</compile_context>

<pallas_src>
import jax
import jax.numpy as jnp
import numpy as np
from jax.experimental import pallas as pl
from jax.experimental.pallas import tpu as pltpu


def _round_up(v, m):
    return -(-v // m) * m


def _make_classifier_kernel(C, hw_tile, HW, needs_mask):
    n_chunks = hw_tile // 128

    def kernel(x_ref, w1_ref, b1_ref, w2_ref, b2_ref, out_ref, m_ref):
        # x_ref:  (C, hw_tile)   one spatial tile of one batch element (native dtype)
        # w1_ref: (C, C)         Linear1 weight, transposed to (in, out)
        # b1_ref: (1, C)         Linear1 bias row
        # w2_ref: (C, nc)        Linear2 weight, transposed to (in, out)
        # b2_ref: (1, nc)        Linear2 bias row
        # out_ref:(1, nc)        logits row for this batch element
        # m_ref:  (C, 128) f32   lane-dense running-max scratch
        t = pl.program_id(1)

        @pl.when(t == 0)
        def _():
            m_ref[...] = jnp.full(m_ref.shape, -jnp.inf, m_ref.dtype)

        if needs_mask:
            lane = jax.lax.broadcasted_iota(jnp.int32, (C, 128), 1)
            base = t * hw_tile

        # VPU-only per-tile fold: elementwise max over static 128-lane chunks.
        acc = m_ref[...]
        for k in range(n_chunks):
            chunk = x_ref[:, k * 128:(k + 1) * 128].astype(jnp.float32)
            if needs_mask:
                pos = base + (k * 128) + lane
                chunk = jnp.where(pos < HW, chunk, -jnp.inf)
            acc = jnp.maximum(acc, chunk)
        m_ref[...] = acc

        @pl.when(t == pl.num_programs(1) - 1)
        def _():
            # One-time XLU work: transpose so channels land on lanes, then fold
            # the chunk axis (sublanes) -> pooled row (1, C).
            mt = m_ref[...].T                                  # (128, C)
            pooled = jnp.max(mt, axis=0, keepdims=True)        # (1, C)
            # Linear1 + ReLU: (1,C) @ (C,C) + (1,C)
            h = jnp.dot(pooled, w1_ref[...],
                        preferred_element_type=jnp.float32) + b1_ref[...]
            h = jnp.maximum(h, 0.0)
            # Linear2: (1,C) @ (C,nc) + (1,nc) -> lane-dense row store.
            logits = jnp.dot(h, w2_ref[...],
                             preferred_element_type=jnp.float32) + b2_ref[...]
            out_ref[...] = logits.astype(out_ref.dtype)

    return kernel


def classifier_forward(x_nchw, w1, b1, w2, b2, *, hw_tile=2048):
    """Forward pass of Classifier.

    x_nchw: (N, 128, H, W), any float dtype (streamed natively, no wrapper cast).
    w1: (128, 128), b1: (128,), w2: (num_classes, 128), b2: (num_classes,)
    -- PyTorch nn.Linear layout.
    """
    N, C, H, W = x_nchw.shape
    assert C == 128, "Classifier expects 128 input channels"
    num_classes = w2.shape[0]
    HW = H * W

    # Lane-aligned spatial tile: multiple of 128, no larger than needed.
    hw_tile = max(128, min(_round_up(hw_tile, 128), _round_up(HW, 128)))
    T = -(-HW // hw_tile)                      # number of spatial tiles
    needs_mask = (HW % hw_tile) != 0           # static: tail tile must be masked

    # Contiguous reshape only -- no HBM pad / transpose / dtype blow-up.
    x = x_nchw.reshape(N, C, HW)

    # One-time tiny weight transposes (64 KiB) -> row-oriented matmuls and a
    # lane-dense output store.
    w1t = jnp.asarray(w1, jnp.float32).T                       # (in=128, out=128)
    b1r = jnp.asarray(b1, jnp.float32).reshape(1, C)           # (1, 128)
    w2t = jnp.asarray(w2, jnp.float32).T                       # (128, nc)
    b2r = jnp.asarray(b2, jnp.float32).reshape(1, num_classes)  # (1, nc)

    x_itemsize = jnp.dtype(x_nchw.dtype).itemsize
    flops = 2 * N * (C * C + C * num_classes)
    bytes_accessed = (N * C * HW * x_itemsize
                      + 4 * (C * C + C + C * num_classes + num_classes)
                      + 4 * N * num_classes)

    # Explicit VMEM budget: double-buffered input tile + resident weights
    # (double-buffered) + (128,128) scratch + headroom.  Capped for v7x.
    weight_bytes = 4 * (C * C + C + C * num_classes + num_classes)
    vmem_limit = int(3 * C * hw_tile * x_itemsize + 2 * weight_bytes
                     + 4 * C * 128 + (4 << 20))
    vmem_limit = max(16 << 20, min(vmem_limit, 64 << 20))

    kernel = _make_classifier_kernel(C, hw_tile, HW, needs_mask)

    out = pl.pallas_call(
        kernel,
        out_shape=jax.ShapeDtypeStruct((N, 1, num_classes), jnp.float32),
        grid_spec=pltpu.PrefetchScalarGridSpec(
            num_scalar_prefetch=0,
            grid=(N, T),
            in_specs=[
                pl.BlockSpec((pl.Squeezed(), C, hw_tile),
                             lambda n, t: (n, 0, t)),
                pl.BlockSpec((C, C), lambda n, t: (0, 0)),
                pl.BlockSpec((1, C), lambda n, t: (0, 0)),
                pl.BlockSpec((C, num_classes), lambda n, t: (0, 0)),
                pl.BlockSpec((1, num_classes), lambda n, t: (0, 0)),
            ],
            out_specs=pl.BlockSpec((pl.Squeezed(), 1, num_classes),
                                   lambda n, t: (n, 0, 0)),
            scratch_shapes=[pltpu.VMEM((C, 128), jnp.float32)],
        ),
        compiler_params=pltpu.CompilerParams(
            dimension_semantics=("parallel", "arbitrary"),
            vmem_limit_bytes=vmem_limit),
        cost_estimate=pl.CostEstimate(
            flops=flops, transcendentals=0, bytes_accessed=bytes_accessed),
    )(x, w1t, b1r, w2t, b2r)

    return out.reshape(N, num_classes)


def _reference(x, w1, b1, w2, b2):
    """Pure-JAX reference: global max pool -> Linear -> ReLU -> Linear."""
    pooled = jnp.max(x.astype(jnp.float32), axis=(2, 3))              # (N, 128)
    h = jnp.maximum(
        jnp.dot(pooled, w1.T, precision=jax.lax.Precision.HIGHEST) + b1, 0.0)
    return jnp.dot(h, w2.T, precision=jax.lax.Precision.HIGHEST) + b2


if __name__ == "__main__":
    key = jax.random.PRNGKey(0)
    ks = jax.random.split(key, 5)

    # Small shapes consistent with the module (in_features=128 is fixed).
    # H=W=24 -> HW=576: exercises multi-tile running max AND the ragged-tail
    # in-kernel mask (576 = 2*256 + 64).
    N, C, H, W, num_classes = 2, 128, 24, 24, 10

    x = jax.random.normal(ks[0], (N, C, H, W), jnp.float32)
    # nn.Linear weight layout: (out_features, in_features).
    w1 = 0.05 * jax.random.normal(ks[1], (128, 128), jnp.float32)
    b1 = 0.05 * jax.random.normal(ks[2], (128,), jnp.float32)
    w2 = 0.05 * jax.random.normal(ks[3], (num_classes, 128), jnp.float32)
    b2 = 0.05 * jax.random.normal(ks[4], (num_classes,), jnp.float32)

    ref = _reference(x, w1, b1, w2, b2)

    # Path 1: small tile -> 3 pipelined reduction steps + masked tail.
    out = jax.block_until_ready(
        classifier_forward(x, w1, b1, w2, b2, hw_tile=256))
    np.testing.assert_allclose(np.asarray(out), np.asarray(ref),
                               atol=2e-4, rtol=2e-4)

    # Path 2: default large tile -> single (capped) tile + masked tail.
    out2 = jax.block_until_ready(classifier_forward(x, w1, b1, w2, b2))
    np.testing.assert_allclose(np.asarray(out2), np.asarray(ref),
                               atol=2e-4, rtol=2e-4)

    assert out.shape == (N, num_classes)
    print("KERNEL_OK")
</pallas_src>

<mosaic_0001>
module attributes {stable_mosaic.version = 11 : i64} {
  func.func @kernel(%arg0: i32, %arg1: i32, %arg2: memref<1x128x256xf32, #tpu.memory_space<vmem>>, %arg3: memref<128x128xf32, #tpu.memory_space<vmem>>, %arg4: memref<1x128xf32, #tpu.memory_space<vmem>>, %arg5: memref<128x10xf32, #tpu.memory_space<vmem>>, %arg6: memref<1x10xf32, #tpu.memory_space<vmem>>, %arg7: memref<1x1x10xf32, #tpu.memory_space<vmem>>, %arg8: memref<128x128xf32, #tpu.memory_space<vmem>>) attributes {dimension_semantics = [#tpu.dimension_semantics<parallel>, #tpu.dimension_semantics<arbitrary>], iteration_bounds = array<i64: 2, 3>, scalar_prefetch = 0 : i64, scratch_operands = 1 : i64, tpu.core_type = #tpu.core_type<tc>, window_params = [{transform_indices = @transform_0, window_bounds = array<i64: 1, 128, 256>}, {pipeline_mode = #tpu.pipeline_mode<synchronous>, transform_indices = @transform_1, window_bounds = array<i64: 128, 128>}, {pipeline_mode = #tpu.pipeline_mode<synchronous>, transform_indices = @transform_2, window_bounds = array<i64: 1, 128>}, {pipeline_mode = #tpu.pipeline_mode<synchronous>, transform_indices = @transform_3, window_bounds = array<i64: 128, 10>}, {pipeline_mode = #tpu.pipeline_mode<synchronous>, transform_indices = @transform_4, window_bounds = array<i64: 1, 10>}, {transform_indices = @transform_5, window_bounds = array<i64: 1, 1, 10>}]} {
    %c0_i32 = arith.constant 0 : i32
    %0 = arith.cmpi eq, %arg1, %c0_i32 : i32
    %1 = arith.extui %0 : i1 to i32
    %c0_i32_0 = arith.constant 0 : i32
    %2 = arith.cmpi ne, %1, %c0_i32_0 : i32
    scf.if %2 {
      %cst_13 = arith.constant 0xFF800000 : f32
      %30 = vector.broadcast %cst_13 : f32 to vector<128x128xf32>
      %c0_14 = arith.constant 0 : index
      %c0_15 = arith.constant 0 : index
      %31 = vector.load %arg8[%c0_14, %c0_15] : memref<128x128xf32, #tpu.memory_space<vmem>>, vector<128x128xf32>
      tpu.vector_store %arg8[%c0_14, %c0_15], %30 {strides = array<i32>} : memref<128x128xf32, #tpu.memory_space<vmem>>, vector<128x128xf32>,
    } else {
    }
    %3 = tpu.iota {dimensions = array<i32: 1>} : vector<128x128xi32>
    %c256_i32 = arith.constant 256 : i32
    %4 = arith.muli %arg1, %c256_i32 : i32
    %c0 = arith.constant 0 : index
    %c0_1 = arith.constant 0 : index
    %5 = vector.load %arg8[%c0, %c0_1] : memref<128x128xf32, #tpu.memory_space<vmem>>, vector<128x128xf32>
    %c0_2 = arith.constant 0 : index
    %c0_3 = arith.constant 0 : index
    %c0_4 = arith.constant 0 : index
    %6 = vector.load %arg2[%c0_2, %c0_3, %c0_4] : memref<1x128x256xf32, #tpu.memory_space<vmem>>, vector<1x128x128xf32>
    %7 = vector.shape_cast %6 : vector<1x128x128xf32> to vector<128x128xf32>
    %c0_i32_5 = arith.constant 0 : i32
    %8 = arith.addi %4, %c0_i32_5 : i32
    %9 = vector.broadcast %8 : i32 to vector<128x128xi32>
    %10 = arith.addi %9, %3 : vector<128x128xi32>
    %c576_i32 = arith.constant 576 : i32
    %11 = vector.broadcast %c576_i32 : i32 to vector<128x128xi32>
    %12 = arith.cmpi slt, %10, %11 : vector<128x128xi32>
    %cst = arith.constant 0xFF800000 : f32
    %13 = vector.broadcast %cst : f32 to vector<128x128xf32>
    %14 = arith.select %12, %7, %13 : vector<128x128xi1>, vector<128x128xf32>
    %15 = arith.maximumf %5, %14 : vector<128x128xf32>
    %c0_6 = arith.constant 0 : index
    %c0_7 = arith.constant 0 : index
    %c128 = arith.constant 128 : index
    %16 = vector.load %arg2[%c0_6, %c0_7, %c128] : memref<1x128x256xf32, #tpu.memory_space<vmem>>, vector<1x128x128xf32>
    %17 = vector.shape_cast %16 : vector<1x128x128xf32> to vector<128x128xf32>
    %c128_i32 = arith.constant 128 : i32
    %18 = arith.addi %4, %c128_i32 : i32
    %19 = vector.broadcast %18 : i32 to vector<128x128xi32>
    %20 = arith.addi %19, %3 : vector<128x128xi32>
    %c576_i32_8 = arith.constant 576 : i32
    %21 = vector.broadcast %c576_i32_8 : i32 to vector<128x128xi32>
    %22 = arith.cmpi slt, %20, %21 : vector<128x128xi32>
    %cst_9 = arith.constant 0xFF800000 : f32
    %23 = vector.broadcast %cst_9 : f32 to vector<128x128xf32>
    %24 = arith.select %22, %17, %23 : vector<128x128xi1>, vector<128x128xf32>
    %25 = arith.maximumf %15, %24 : vector<128x128xf32>
    %c0_10 = arith.constant 0 : index
    %c0_11 = arith.constant 0 : index
    %26 = vector.load %arg8[%c0_10, %c0_11] : memref<128x128xf32, #tpu.memory_space<vmem>>, vector<128x128xf32>
    tpu.vector_store %arg8[%c0_10, %c0_11], %25 {strides = array<i32>} : memref<128x128xf32, #tpu.memory_space<vmem>>, vector<128x128xf32>,
    %c2_i32 = arith.constant 2 : i32
    %27 = arith.cmpi eq, %arg1, %c2_i32 : i32
    %28 = arith.extui %27 : i1 to i32
    %c0_i32_12 = arith.constant 0 : i32
    %29 = arith.cmpi ne, %28, %c0_i32_12 : i32
    scf.if %29 {
      %c0_13 = arith.constant 0 : index
      %c0_14 = arith.constant 0 : index
      %30 = vector.load %arg8[%c0_13, %c0_14] : memref<128x128xf32, #tpu.memory_space<vmem>>, vector<128x128xf32>
      %31 = tpu.transpose %30, [1, 0] : vector<128x128xf32> -> vector<128x128xf32>
      %cst_15 = arith.constant dense<0xFF800000> : vector<128xf32>
      %32 = vector.multi_reduction <maximumf>, %31, %cst_15 [0] : vector<128x128xf32> to vector<128xf32>
      %33 = vector.shape_cast %32 : vector<128xf32> to vector<1x128xf32>
      %c0_16 = arith.constant 0 : index
      %c0_17 = arith.constant 0 : index
      %34 = vector.load %arg3[%c0_16, %c0_17] : memref<128x128xf32, #tpu.memory_space<vmem>>, vector<128x128xf32>
      %cst_18 = arith.constant dense<0.000000e+00> : vector<1x128xf32>
      %35 = tpu.matmul %33, %34, %cst_18 {dimension_numbers = #tpu.dot_dimension_numbers<[1], [0], [0], [1], [0, 0, 1, 1], [], []>} : vector<1x128xf32>, vector<128x128xf32>, vector<1x128xf32> -> vector<1x128xf32>
      %c0_19 = arith.constant 0 : index
      %c0_20 = arith.constant 0 : index
      %36 = vector.load %arg4[%c0_19, %c0_20] : memref<1x128xf32, #tpu.memory_space<vmem>>, vector<1x128xf32>
      %37 = arith.addf %35, %36 : vector<1x128xf32>
      %cst_21 = arith.constant 0.000000e+00 : f32
      %38 = vector.broadcast %cst_21 : f32 to vector<1x128xf32>
      %39 = arith.maximumf %37, %38 : vector<1x128xf32>
      %c0_22 = arith.constant 0 : index
      %c0_23 = arith.constant 0 : index
      %40 = vector.load %arg5[%c0_22, %c0_23] : memref<128x10xf32, #tpu.memory_space<vmem>>, vector<128x10xf32>
      %cst_24 = arith.constant dense<0.000000e+00> : vector<1x10xf32>
      %41 = tpu.matmul %39, %40, %cst_24 {dimension_numbers = #tpu.dot_dimension_numbers<[1], [0], [0], [1], [0, 0, 1, 1], [], []>} : vector<1x128xf32>, vector<128x10xf32>, vector<1x10xf32> -> vector<1x10xf32>
      %c0_25 = arith.constant 0 : index
      %c0_26 = arith.constant 0 : index
      %42 = vector.load %arg6[%c0_25, %c0_26] : memref<1x10xf32, #tpu.memory_space<vmem>>, vector<1x10xf32>
      %43 = arith.addf %41, %42 : vector<1x10xf32>
      %c0_27 = arith.constant 0 : index
      %c0_28 = arith.constant 0 : index
      %c0_29 = arith.constant 0 : index
      %44 = vector.load %arg7[%c0_27, %c0_28, %c0_29] : memref<1x1x10xf32, #tpu.memory_space<vmem>>, vector<1x1x10xf32>
      %45 = vector.shape_cast %44 : vector<1x1x10xf32> to vector<1x10xf32>
      %46 = vector.shape_cast %43 : vector<1x10xf32> to vector<1x1x10xf32>
      tpu.vector_store %arg7[%c0_27, %c0_28, %c0_29], %46 {strides = array<i32>} : memref<1x1x10xf32, #tpu.memory_space<vmem>>, vector<1x1x10xf32>,
    } else {
    }
    return
  }
  func.func @transform_0(%arg0: i32, %arg1: i32) -> (i32, i32, i32) {
    %c0_i32 = arith.constant 0 : i32
    %c0_i32_0 = arith.constant 0 : i32
    return %arg0, %c0_i32, %arg1 : i32, i32, i32
  }
  func.func @transform_1(%arg0: i32, %arg1: i32) -> (i32, i32) {
    %c0_i32 = arith.constant 0 : i32
    %c0_i32_0 = arith.constant 0 : i32
    %c0_i32_1 = arith.constant 0 : i32
    return %c0_i32, %c0_i32_0 : i32, i32
  }
  func.func @transform_2(%arg0: i32, %arg1: i32) -> (i32, i32) {
    %c0_i32 = arith.constant 0 : i32
    %c0_i32_0 = arith.constant 0 : i32
    %c0_i32_1 = arith.constant 0 : i32
    return %c0_i32, %c0_i32_0 : i32, i32
  }
  func.func @transform_3(%arg0: i32, %arg1: i32) -> (i32, i32) {
    %c0_i32 = arith.constant 0 : i32
    %c0_i32_0 = arith.constant 0 : i32
    %c0_i32_1 = arith.constant 0 : i32
    return %c0_i32, %c0_i32_0 : i32, i32
  }
  func.func @transform_4(%arg0: i32, %arg1: i32) -> (i32, i32) {
    %c0_i32 = arith.constant 0 : i32
    %c0_i32_0 = arith.constant 0 : i32
    %c0_i32_1 = arith.constant 0 : i32
    return %c0_i32, %c0_i32_0 : i32, i32
  }
  func.func @transform_5(%arg0: i32, %arg1: i32) -> (i32, i32, i32) {
    %c0_i32 = arith.constant 0 : i32
    %c0_i32_0 = arith.constant 0 : i32
    %c0_i32_1 = arith.constant 0 : i32
    return %arg0, %c0_i32, %c0_i32_0 : i32, i32, i32
  }
}

</mosaic_0001>

<llo_original>
// kernel: tpu_custom_call.1
$region0: #{tpu_custom_call.1}
  #allocation0 [shape = 'u32[]', space=smem, size = 0x4, offset = 0x4, fixed_abs, tag = 'smem constant byte address 0x4 - core index']
  #allocation1 [shape = 'u32[144,128]{1,0:T(1,128)}', space=vmem, size = 0x12000, scoped, tag = 'internal scratch']
  #allocation2 [shape = 'f32[128,128]{1,0:T(8,128)}', space=vmem, size = 0x10000, scoped, tag = 'scratch operand']
  %s0 = inlined_call_operand.vmem [shape: f32[2,128,576], index: 0, kind: input, shape index: {}]
  %s1 = inlined_call_operand.vmem [shape: f32[128,128], index: 1, kind: input, shape index: {}]
  %s2 = inlined_call_operand.vmem [shape: f32[1,128], index: 2, kind: input, shape index: {}]
  %s3 = inlined_call_operand.vmem [shape: f32[128,10], index: 3, kind: input, shape index: {}]
  %s4 = inlined_call_operand.vmem [shape: f32[1,10], index: 4, kind: input, shape index: {}]
  %s5 = inlined_call_operand.hbm [shape: f32[2,1,10], index: 5, kind: output, shape index: {}]
  %s6 = sld [smem:[#allocation0]]
  $region127: #{tpu_custom_call.1} parent=0
    _
  %s8 = ssub.s32 1, %s6
  %s9 = scalar_select 0, %s8, %s6
  $region1: #{tpu_custom_call.1} parent=0
    #allocation3 [shape = 'u8[262144]{0}', space=vmem, size = 0x40000, scoped, tag = 'input window, operand 0']
    #allocation4 [shape = 'u8[1024]{0}', space=vmem, size = 0x400, scoped, tag = 'output window, operand 0']
    #allocation5 [shape = 's32[2]{0}', space=sflag, size = 0x8, scoped, tag = 'scoped memory for tpu_custom_call.1']
    %10 = vsyncpa [#allocation5], 0
    %s11 = scalar_lea.sflag [#allocation5], 1
    %12 = vsyncpa %s11, 0
    loop: start=0, step=1, limit=8
    $region2: #{tpu_custom_call.1} parent=1 // loop_pre_header
      _
    $region3: #{tpu_custom_call.1} parent=1 // loop_header
      %s14 = sphi 0, %s18
      %p15 = scmp.ge.s32.totalorder %s14, 8
      %s21 = sphi 0, %s33
      %s22 = sphi 0, %s29
      %s23 = sphi 0, %s21
      %s24 = sphi 0, %s22
      %s25 = sphi 0, %s23
      %s26 = sphi 0, %s24
      %s38 = sphi 0, %s40
      %s41 = sphi 0, %s38
      %s42 = sphi 0, %s41
      %s58 = sphi 0, %s42
      %s62 = sphi 0, %s62
      %s64 = sphi 0, %s62
      %s65 = sphi 0, %s64
      %s79 = sphi 0, %s65
      %s83 = sphi 0, %s83
      %s85 = sphi 0, %s83
      %s86 = sphi 0, %s85
      %s100 = sphi 0, %s86
      %s104 = sphi 0, %s104
      %s106 = sphi 0, %s104
      %s107 = sphi 0, %s106
      %s121 = sphi 0, %s107
      %s125 = sphi 0, %s125
      %s127 = sphi 0, %s125
      %s128 = sphi 0, %s127
      %s142 = sphi 0, %s128
      %s148 = sphi 0, %s150
      %s151 = sphi 0, %s148
      %s152 = sphi 0, %s151
      %s168 = sphi 0, %s152
    $region4: #{tpu_custom_call.1} parent=1 // loop_header_branch
      %17 = sbr.rel (%p15) target = $region8
    $region5: #{tpu_custom_call.1} parent=1 // loop_body
      %s19 = ssub.s32 %s14, 1
      %s20 = ssub.s32 %s14, 2
      %s27 = sadd.s32 1, %s22
      %p28 = scmp.ge.s32.totalorder %s27, 3
      %s29 = scalar_select %p28, 0, %s27
      %s30 = sadd.s32 1, %s21
      %s31 = scalar_select %p28, %s30, %s21
      %p32 = scmp.ge.s32.totalorder %s31, 2
      %s33 = scalar_select %p32, 0, %s31
      %s34 = ssub.s32 %s21, %s33
      %s35 = ssub.s32 %s22, %s29
      %s36 = sor.u32 %s34, %s35
      %p37 = scmp.eq.s32.totalorder %s36, 0
      %s39 = sadd.s32 %s38, 1
      %s40 = scalar_select %p37, %s38, %s39
      %p43 = pneg %p37
      %p44 = scmp.eq.s32.totalorder %s14, 5
      %p45 = por %p43, %p44
      %p46 = scmp.ne.s32.totalorder %s38, %s41
      %p47 = scmp.eq.s32.totalorder %s14, 0
      %p48 = por %p46, %p47
      %p49 = scmp.ne.s32.totalorder %s38, %s41
      %p50 = scmp.eq.s32.totalorder %s19, 5
      %p51 = por %p49, %p50
      %p52 = scmp.ne.s32.totalorder %s41, %s42
      %p53 = scmp.eq.s32.totalorder %s19, 0
      %p54 = por %p52, %p53
      %p55 = scmp.ne.s32.totalorder %s41, %s42
      %p56 = scmp.eq.s32.totalorder %s20, 5
      %p57 = por %p55, %p56
      %p59 = scmp.ne.s32.totalorder %s42, %s58
      %p60 = scmp.eq.s32.totalorder %s20, 0
      %p61 = por %p59, %p60
      %s63 = sadd.s32 %s62, 1
      %p66 = scmp.eq.s32.totalorder %s14, 5
      %p67 = scmp.ne.s32.totalorder %s62, %s64
      %p68 = scmp.eq.s32.totalorder %s14, 0
      %p69 = por %p67, %p68
      %p70 = scmp.ne.s32.totalorder %s62, %s64
      %p71 = scmp.eq.s32.totalorder %s19, 5
      %p72 = por %p70, %p71
      %p73 = scmp.ne.s32.totalorder %s64, %s65
      %p74 = scmp.eq.s32.totalorder %s19, 0
      %p75 = por %p73, %p74
      %p76 = scmp.ne.s32.totalorder %s64, %s65
      %p77 = scmp.eq.s32.totalorder %s20, 5
      %p78 = por %p76, %p77
      %p80 = scmp.ne.s32.totalorder %s65, %s79
      %p81 = scmp.eq.s32.totalorder %s20, 0
      %p82 = por %p80, %p81
      %s84 = sadd.s32 %s83, 1
      %p87 = scmp.eq.s32.totalorder %s14, 5
      %p88 = scmp.ne.s32.totalorder %s83, %s85
      %p89 = scmp.eq.s32.totalorder %s14, 0
      %p90 = por %p88, %p89
      %p91 = scmp.ne.s32.totalorder %s83, %s85
      %p92 = scmp.eq.s32.totalorder %s19, 5
      %p93 = por %p91, %p92
      %p94 = scmp.ne.s32.totalorder %s85, %s86
      %p95 = scmp.eq.s32.totalorder %s19, 0
      %p96 = por %p94, %p95
      %p97 = scmp.ne.s32.totalorder %s85, %s86
      %p98 = scmp.eq.s32.totalorder %s20, 5
      %p99 = por %p97, %p98
      %p101 = scmp.ne.s32.totalorder %s86, %s100
      %p102 = scmp.eq.s32.totalorder %s20, 0
      %p103 = por %p101, %p102
      %s105 = sadd.s32 %s104, 1
      %p108 = scmp.eq.s32.totalorder %s14, 5
      %p109 = scmp.ne.s32.totalorder %s104, %s106
      %p110 = scmp.eq.s32.totalorder %s14, 0
      %p111 = por %p109, %p110
      %p112 = scmp.ne.s32.totalorder %s104, %s106
      %p113 = scmp.eq.s32.totalorder %s19, 5
      %p114 = por %p112, %p113
      %p115 = scmp.ne.s32.totalorder %s106, %s107
      %p116 = scmp.eq.s32.totalorder %s19, 0
      %p117 = por %p115, %p116
      %p118 = scmp.ne.s32.totalorder %s106, %s107
      %p119 = scmp.eq.s32.totalorder %s20, 5
      %p120 = por %p118, %p119
      %p122 = scmp.ne.s32.totalorder %s107, %s121
      %p123 = scmp.eq.s32.totalorder %s20, 0
      %p124 = por %p122, %p123
      %s126 = sadd.s32 %s125, 1
      %p129 = scmp.eq.s32.totalorder %s14, 5
      %p130 = scmp.ne.s32.totalorder %s125, %s127
      %p131 = scmp.eq.s32.totalorder %s14, 0
      %p132 = por %p130, %p131
      %p133 = scmp.ne.s32.totalorder %s125, %s127
      %p134 = scmp.eq.s32.totalorder %s19, 5
      %p135 = por %p133, %p134
      %p136 = scmp.ne.s32.totalorder %s127, %s128
      %p137 = scmp.eq.s32.totalorder %s19, 0
      %p138 = por %p136, %p137
      %p139 = scmp.ne.s32.totalorder %s127, %s128
      %p140 = scmp.eq.s32.totalorder %s20, 5
      %p141 = por %p139, %p140
      %p143 = scmp.ne.s32.totalorder %s128, %s142
      %p144 = scmp.eq.s32.totalorder %s20, 0
      %p145 = por %p143, %p144
      %s146 = ssub.s32 %s21, %s33
      %p147 = scmp.eq.s32.totalorder %s146, 0
      %s149 = sadd.s32 %s148, 1
      %s150 = scalar_select %p147, %s148, %s149
      %p153 = pneg %p147
      %p154 = scmp.eq.s32.totalorder %s14, 5
      %p155 = por %p153, %p154
      %p156 = scmp.ne.s32.totalorder %s148, %s151
      %p157 = scmp.eq.s32.totalorder %s14, 0
      %p158 = por %p156, %p157
      %p159 = scmp.ne.s32.totalorder %s148, %s151
      %p160 = scmp.eq.s32.totalorder %s19, 5
      %p161 = por %p159, %p160
      %p162 = scmp.ne.s32.totalorder %s151, %s152
      %p163 = scmp.eq.s32.totalorder %s19, 0
      %p164 = por %p162, %p163
      %p165 = scmp.ne.s32.totalorder %s151, %s152
      %p166 = scmp.eq.s32.totalorder %s20, 5
      %p167 = por %p165, %p166
      %p169 = scmp.ne.s32.totalorder %s152, %s168
      %p170 = scmp.eq.s32.totalorder %s20, 0
      %p171 = por %p169, %p170
      %p172 = scmp.le.s32.totalorder 1, %s14
      %p173 = scmp.lt.s32.totalorder %s14, 7
      %p174 = pnand %p172, %p173
      %p175 = pneg %p174
      // Predicated region
      $region9: #{tpu_custom_call.1} parent=5 // pred_check
        _
      $region10: #{tpu_custom_call.1} parent=5 // pred_check_branch
        %177 = sbr.rel (%p174) target = $region12
      $region11: #{tpu_custom_call.1} parent=5 // pred_region
        %s178 = ssub.s32 %s14, 1
        // Predicated region
        $region13: #{tpu_custom_call.1} parent=11 // pred_check
          %p179 = pneg %p75
        $region14: #{tpu_custom_call.1} parent=11 // pred_check_branch
          %181 = sbr.rel (%p179) target = $region16
        $region15: #{tpu_custom_call.1} parent=11 // pred_region
          _
        $region16: #{tpu_custom_call.1} parent=11 // pred_fallthru
          _
        // Predicated region
        $region17: #{tpu_custom_call.1} parent=11 // pred_check
          %p182 = pneg %p96
        $region18: #{tpu_custom_call.1} parent=11 // pred_check_branch
          %184 = sbr.rel (%p182) target = $region20
        $region19: #{tpu_custom_call.1} parent=11 // pred_region
          _
        $region20: #{tpu_custom_call.1} parent=11 // pred_fallthru
          _
        // Predicated region
        $region21: #{tpu_custom_call.1} parent=11 // pred_check
          %p185 = pneg %p117
        $region22: #{tpu_custom_call.1} parent=11 // pred_check_branch
          %187 = sbr.rel (%p185) target = $region24
        $region23: #{tpu_custom_call.1} parent=11 // pred_region
          _
        $region24: #{tpu_custom_call.1} parent=11 // pred_fallthru
          _
        // Predicated region
        $region25: #{tpu_custom_call.1} parent=11 // pred_check
          %p188 = pneg %p138
        $region26: #{tpu_custom_call.1} parent=11 // pred_check_branch
          %190 = sbr.rel (%p188) target = $region28
        $region27: #{tpu_custom_call.1} parent=11 // pred_region
          _
        $region28: #{tpu_custom_call.1} parent=11 // pred_fallthru
          _
      $region12: #{tpu_custom_call.1} parent=5 // pred_fallthru
        _
      %p191 = scmp.lt.s32.totalorder %s14, 6
      // Predicated region
      $region29: #{tpu_custom_call.1} parent=5 // pred_check
        %p192 = pneg %p191
      $region30: #{tpu_custom_call.1} parent=5 // pred_check_branch
        %194 = sbr.rel (%p192) target = $region32
      $region31: #{tpu_custom_call.1} parent=5 // pred_region
        // Predicated region
        $region33: #{tpu_custom_call.1} parent=31 // pred_check
          %p195 = pneg %p48
        $region34: #{tpu_custom_call.1} parent=31 // pred_check_branch
          %197 = sbr.rel (%p195) target = $region36
        $region35: #{tpu_custom_call.1} parent=31 // pred_region
          %s198 = sand.u32 %s38, 1
          %s199 = sand.u32 %s38, 1
          %s200 = smul.addr %s199, 256
          %s201 = scalar_lea.vmem [#allocation3], %s200
          %s202 = smul.u32 2, %s22
          %s203 = ssub.s32 5, %s202
          %p204 = scmp.lt.s32.totalorder %s203, 2
          %s205 = scalar_select %p204, %s203, 2
          %s206 = smul.u32 2048, %s205
          %p207 = scmp.ne.s32.totalorder 0, %s206
          %s208 = smul.addr %s21, 80
          %s209 = sadd.s32 %s202, %s208
          %s210 = smul.addr %s209, 8
          %s211 = scalar_lea.vmem %s0, %s210
          %s212 = smul.u32 %s205, 8
          // Predicated region
          $region37: #{tpu_custom_call.1} parent=35 // pred_check
            %p213 = pneg %p207
          $region38: #{tpu_custom_call.1} parent=35 // pred_check_branch
            %215 = sbr.rel (%p213) target = $region40
          $region39: #{tpu_custom_call.1} parent=35 // pred_region
            %p216 = scmp.lt.u32.totalorder %s212, 8
            %p217 = pneg %p216
            // Predicated region
            $region41: #{tpu_custom_call.1} parent=39 // pred_check
              _
            $region42: #{tpu_custom_call.1} parent=39 // pred_check_branch
              %219 = sbr.rel (%p216) target = $region44
            $region43: #{tpu_custom_call.1} parent=39 // pred_region
              %s265 = sand.u32 %s212, 7
              %p266 = scmp.eq.s32.totalorder %s265, 0
              // Predicated region
              $region56: #{tpu_custom_call.1} parent=43 // pred_check
                %p267 = pneg %p266
              $region57: #{tpu_custom_call.1} parent=43 // pred_check_branch
                %269 = sbr.rel (%p267) target = $region59
              $region58: #{tpu_custom_call.1} parent=43 // pred_region
                %s270 = sshrl.u32 %s212, 3
                %s271 = sshrl.u32 %s270, 2
                // While loop
                $region60: #{tpu_custom_call.1} parent=58 // loop_pre_header
                  _
                $region61: #{tpu_custom_call.1} parent=58 // loop_header
                  %s275 = sphi 0, %s277
                  %p276 = scmp.ge.s32.totalorder %s275, %s271
                  %s280 = sphi 0, %s413
                  %s281 = sphi %s211, %s416
                  %s282 = sphi %s201, %s417
                $region62: #{tpu_custom_call.1} parent=58 // loop_header_branch
                  %279 = sbr.rel (%p276) target = $region66
                $region63: #{tpu_custom_call.1} parent=58 // loop_body
                  %v283 = vld [vmem:[%s281] sm:$0xff]
                  %284 = vst [vmem:[%s282] sm:$0xff] %v283
                  %v285 = vld [vmem:[%s281 + $0x8] sm:$0xff]
                  %286 = vst [vmem:[%s282 + $0x8] sm:$0xff] %v285
                  %v287 = vld [vmem:[%s281 + $0x10] sm:$0xff]
                  %288 = vst [vmem:[%s282 + $0x10] sm:$0xff] %v287
                  %v289 = vld [vmem:[%s281 + $0x18] sm:$0xff]
                  %290 = vst [vmem:[%s282 + $0x18] sm:$0xff] %v289
                  %v291 = vld [vmem:[%s281 + $0x28] sm:$0xff]
                  %292 = vst [vmem:[%s282 + $0x10] sm:$0xff] %v291
                  %v293 = vld [vmem:[%s281 + $0x30] sm:$0xff]
                  %294 = vst [vmem:[%s282 + $0x18] sm:$0xff] %v293
                  %v295 = vld [vmem:[%s281 + $0x38] sm:$0xff]
                  %296 = vst [vmem:[%s282 + $0x20] sm:$0xff] %v295
                  %v297 = vld [vmem:[%s281 + $0x40] sm:$0xff]
                  %298 = vst [vmem:[%s282 + $0x28] sm:$0xff] %v297
                  %v299 = vld [vmem:[%s281 + $0x50] sm:$0xff]
                  %300 = vst [vmem:[%s282 + $0x20] sm:$0xff] %v299
                  %v301 = vld [vmem:[%s281 + $0x58] sm:$0xff]
                  %302 = vst [vmem:[%s282 + $0x28] sm:$0xff] %v301
                  %v303 = vld [vmem:[%s281 + $0x60] sm:$0xff]
                  %304 = vst [vmem:[%s282 + $0x30] sm:$0xff] %v303
                  %v305 = vld [vmem:[%s281 + $0x68] sm:$0xff]
                  %306 = vst [vmem:[%s282 + $0x38] sm:$0xff] %v305
                  %v307 = vld [vmem:[%s281 + $0x78] sm:$0xff]
                  %308 = vst [vmem:[%s282 + $0x30] sm:$0xff] %v307
                  %v309 = vld [vmem:[%s281 + $0x80] sm:$0xff]
                  %310 = vst [vmem:[%s282 + $0x38] sm:$0xff] %v309
                  %v311 = vld [vmem:[%s281 + $0x88] sm:$0xff]
                  %312 = vst [vmem:[%s282 + $0x40] sm:$0xff] %v311
                  %v313 = vld [vmem:[%s281 + $0x90] sm:$0xff]
                  %314 = vst [vmem:[%s282 + $0x48] sm:$0xff] %v313
                  %v315 = vld [vmem:[%s281 + $0xa0] sm:$0xff]
                  %316 = vst [vmem:[%s282 + $0x40] sm:$0xff] %v315
                  %v317 = vld [vmem:[%s281 + $0xa8] sm:$0xff]
                  %318 = vst [vmem:[%s282 + $0x48] sm:$0xff] %v317
                  %v319 = vld [vmem:[%s281 + $0xb0] sm:$0xff]
                  %320 = vst [vmem:[%s282 + $0x50] sm:$0xff] %v319
                  %v321 = vld [vmem:[%s281 + $0xb8] sm:$0xff]
                  %322 = vst [vmem:[%s282 + $0x58] sm:$0xff] %v321
                  %v323 = vld [vmem:[%s281 + $0xc8] sm:$0xff]
                  %324 = vst [vmem:[%s282 + $0x50] sm:$0xff] %v323
                  %v325 = vld [vmem:[%s281 + $0xd0] sm:$0xff]
                  %326 = vst [vmem:[%s282 + $0x58] sm:$0xff] %v325
                  %v327 = vld [vmem:[%s281 + $0xd8] sm:$0xff]
                  %328 = vst [vmem:[%s282 + $0x60] sm:$0xff] %v327
                  %v329 = vld [vmem:[%s281 + $0xe0] sm:$0xff]
                  %330 = vst [vmem:[%s282 + $0x68] sm:$0xff] %v329
                  %v331 = vld [vmem:[%s281 + $0xf0] sm:$0xff]
                  %332 = vst [vmem:[%s282 + $0x60] sm:$0xff] %v331
                  %v333 = vld [vmem:[%s281 + $0xf8] sm:$0xff]
                  %334 = vst [vmem:[%s282 + $0x68] sm:$0xff] %v333
                  %v335 = vld [vmem:[%s281 + $0x100] sm:$0xff]
                  %336 = vst [vmem:[%s282 + $0x70] sm:$0xff] %v335
                  %v337 = vld [vmem:[%s281 + $0x108] sm:$0xff]
                  %338 = vst [vmem:[%s282 + $0x78] sm:$0xff] %v337
                  %v339 = vld [vmem:[%s281 + $0x118] sm:$0xff]
                  %340 = vst [vmem:[%s282 + $0x70] sm:$0xff] %v339
                  %v341 = vld [vmem:[%s281 + $0x120] sm:$0xff]
                  %342 = vst [vmem:[%s282 + $0x78] sm:$0xff] %v341
                  %v343 = vld [vmem:[%s281 + $0x128] sm:$0xff]
                  %344 = vst [vmem:[%s282 + $0x80] sm:$0xff] %v343
                  %v345 = vld [vmem:[%s281 + $0x130] sm:$0xff]
                  %346 = vst [vmem:[%s282 + $0x88] sm:$0xff] %v345
                  %v347 = vld [vmem:[%s281 + $0x140] sm:$0xff]
                  %348 = vst [vmem:[%s282 + $0x80] sm:$0xff] %v347
                  %v349 = vld [vmem:[%s281 + $0x148] sm:$0xff]
                  %350 = vst [vmem:[%s282 + $0x88] sm:$0xff] %v349
                  %v351 = vld [vmem:[%s281 + $0x150] sm:$0xff]
                  %352 = vst [vmem:[%s282 + $0x90] sm:$0xff] %v351
                  %v353 = vld [vmem:[%s281 + $0x158] sm:$0xff]
                  %354 = vst [vmem:[%s282 + $0x98] sm:$0xff] %v353
                  %v355 = vld [vmem:[%s281 + $0x168] sm:$0xff]
                  %356 = vst [vmem:[%s282 + $0x90] sm:$0xff] %v355
                  %v357 = vld [vmem:[%s281 + $0x170] sm:$0xff]
                  %358 = vst [vmem:[%s282 + $0x98] sm:$0xff] %v357
                  %v359 = vld [vmem:[%s281 + $0x178] sm:$0xff]
                  %360 = vst [vmem:[%s282 + $0xa0] sm:$0xff] %v359
                  %v361 = vld [vmem:[%s281 + $0x180] sm:$0xff]
                  %362 = vst [vmem:[%s282 + $0xa8] sm:$0xff] %v361
                  %v363 = vld [vmem:[%s281 + $0x190] sm:$0xff]
                  %364 = vst [vmem:[%s282 + $0xa0] sm:$0xff] %v363
                  %v365 = vld [vmem:[%s281 + $0x198] sm:$0xff]
                  %366 = vst [vmem:[%s282 + $0xa8] sm:$0xff] %v365
                  %v367 = vld [vmem:[%s281 + $0x1a0] sm:$0xff]
                  %368 = vst [vmem:[%s282 + $0xb0] sm:$0xff] %v367
                  %v369 = vld [vmem:[%s281 + $0x1a8] sm:$0xff]
                  %370 = vst [vmem:[%s282 + $0xb8] sm:$0xff] %v369
                  %v371 = vld [vmem:[%s281 + $0x1b8] sm:$0xff]
                  %372 = vst [vmem:[%s282 + $0xb0] sm:$0xff] %v371
                  %v373 = vld [vmem:[%s281 + $0x1c0] sm:$0xff]
                  %374 = vst [vmem:[%s282 + $0xb8] sm:$0xff] %v373
                  %v375 = vld [vmem:[%s281 + $0x1c8] sm:$0xff]
                  %376 = vst [vmem:[%s282 + $0xc0] sm:$0xff] %v375
                  %v377 = vld [vmem:[%s281 + $0x1d0] sm:$0xff]
                  %378 = vst [vmem:[%s282 + $0xc8] sm:$0xff] %v377
                  %v379 = vld [vmem:[%s281 + $0x1e0] sm:$0xff]
                  %380 = vst [vmem:[%s282 + $0xc0] sm:$0xff] %v379
                  %v381 = vld [vmem:[%s281 + $0x1e8] sm:$0xff]
                  %382 = vst [vmem:[%s282 + $0xc8] sm:$0xff] %v381
                  %v383 = vld [vmem:[%s281 + $0x1f0] sm:$0xff]
                  %384 = vst [vmem:[%s282 + $0xd0] sm:$0xff] %v383
                  %v385 = vld [vmem:[%s281 + $0x1f8] sm:$0xff]
                  %386 = vst [vmem:[%s282 + $0xd8] sm:$0xff] %v385
                  %v387 = vld [vmem:[%s281 + $0x208] sm:$0xff]
                  %388 = vst [vmem:[%s282 + $0xd0] sm:$0xff] %v387
                  %v389 = vld [vmem:[%s281 + $0x210] sm:$0xff]
                  %390 = vst [vmem:[%s282 + $0xd8] sm:$0xff] %v389
                  %v391 = vld [vmem:[%s281 + $0x218] sm:$0xff]
                  %392 = vst [vmem:[%s282 + $0xe0] sm:$0xff] %v391
                  %v393 = vld [vmem:[%s281 + $0x220] sm:$0xff]
                  %394 = vst [vmem:[%s282 + $0xe8] sm:$0xff] %v393
                  %v395 = vld [vmem:[%s281 + $0x230] sm:$0xff]
                  %396 = vst [vmem:[%s282 + $0xe0] sm:$0xff] %v395
                  %v397 = vld [vmem:[%s281 + $0x238] sm:$0xff]
                  %398 = vst [vmem:[%s282 + $0xe8] sm:$0xff] %v397
                  %v399 = vld [vmem:[%s281 + $0x240] sm:$0xff]
                  %400 = vst [vmem:[%s282 + $0xf0] sm:$0xff] %v399
                  %v401 = vld [vmem:[%s281 + $0x248] sm:$0xff]
                  %402 = vst [vmem:[%s282 + $0xf8] sm:$0xff] %v401
                  %v403 = vld [vmem:[%s281 + $0x258] sm:$0xff]
                  %404 = vst [vmem:[%s282 + $0xf0] sm:$0xff] %v403
                  %v405 = vld [vmem:[%s281 + $0x260] sm:$0xff]
                  %406 = vst [vmem:[%s282 + $0xf8] sm:$0xff] %v405
                  %v407 = vld [vmem:[%s281 + $0x268] sm:$0xff]
                  %408 = vst [vmem:[%s282 + $0x100] sm:$0xff] %v407
                  %v409 = vld [vmem:[%s281 + $0x270] sm:$0xff]
                  %410 = vst [vmem:[%s282 + $0x108] sm:$0xff] %v409
                  %s411 = sadd.s32 1, %s280
                  %p412 = scmp.ge.s32.totalorder %s411, %s271
                  %s413 = scalar_select %p412, 0, %s411
                  %s414 = smul.u32 %s413, 32
                  %s415 = smul.u32 %s413, 32
                  %s416 = scalar_lea.vmem %s211, %s414
                  %s417 = scalar_lea.vmem %s201, %s415 [#allocation3]
                $region64: #{tpu_custom_call.1} parent=58 // loop_footer
                  %s277 = sadd.s32 %s275, 1
                $region65: #{tpu_custom_call.1} parent=58 // loop_footer_branch
                  %274 = sbr.rel target = $region61
                $region66: #{tpu_custom_call.1} parent=58 // loop_exit
                  _
                %s418 = sshrl.u32 %s270, 2
                %s419 = sand.u32 %s270, 3
                %s420 = smul.u32 %s418, 4
                %s421 = smul.u32 128, %s420
                %s422 = sshra.s32 %s421, 4
                %s423 = scalar_lea.vmem %s211, %s422
                %s424 = smul.u32 128, %s420
                %s425 = sshra.s32 %s424, 4
                %s426 = scalar_lea.vmem %s201, %s425 [#allocation3]
                // While loop
                $region67: #{tpu_custom_call.1} parent=58 // loop_pre_header
                  _
                $region68: #{tpu_custom_call.1} parent=58 // loop_header
                  %s430 = sphi 0, %s432
                  %p431 = scmp.ge.s32.totalorder %s430, %s419
                  %s435 = sphi 0, %s472
                  %s436 = sphi %s423, %s475
                  %s437 = sphi %s426, %s476
                $region69: #{tpu_custom_call.1} parent=58 // loop_header_branch
                  %434 = sbr.rel (%p431) target = $region73
                $region70: #{tpu_custom_call.1} parent=58 // loop_body
                  %v438 = vld [vmem:[%s436] sm:$0xff]
                  %439 = vst [vmem:[%s437] sm:$0xff] %v438
                  %v440 = vld [vmem:[%s436 + $0x28] sm:$0xff]
                  %441 = vst [vmem:[%s437 + $0x10] sm:$0xff] %v440
                  %v442 = vld [vmem:[%s436 + $0x50] sm:$0xff]
                  %443 = vst [vmem:[%s437 + $0x20] sm:$0xff] %v442
                  %v444 = vld [vmem:[%s436 + $0x78] sm:$0xff]
                  %445 = vst [vmem:[%s437 + $0x30] sm:$0xff] %v444
                  %v446 = vld [vmem:[%s436 + $0xa0] sm:$0xff]
                  %447 = vst [vmem:[%s437 + $0x40] sm:$0xff] %v446
                  %v448 = vld [vmem:[%s436 + $0xc8] sm:$0xff]
                  %449 = vst [vmem:[%s437 + $0x50] sm:$0xff] %v448
                  %v450 = vld [vmem:[%s436 + $0xf0] sm:$0xff]
                  %451 = vst [vmem:[%s437 + $0x60] sm:$0xff] %v450
                  %v452 = vld [vmem:[%s436 + $0x118] sm:$0xff]
                  %453 = vst [vmem:[%s437 + $0x70] sm:$0xff] %v452
                  %v454 = vld [vmem:[%s436 + $0x140] sm:$0xff]
                  %455 = vst [vmem:[%s437 + $0x80] sm:$0xff] %v454
                  %v456 = vld [vmem:[%s436 + $0x168] sm:$0xff]
                  %457 = vst [vmem:[%s437 + $0x90] sm:$0xff] %v456
                  %v458 = vld [vmem:[%s436 + $0x190] sm:$0xff]
                  %459 = vst [vmem:[%s437 + $0xa0] sm:$0xff] %v458
                  %v460 = vld [vmem:[%s436 + $0x1b8] sm:$0xff]
                  %461 = vst [vmem:[%s437 + $0xb0] sm:$0xff] %v460
                  %v462 = vld [vmem:[%s436 + $0x1e0] sm:$0xff]
                  %463 = vst [vmem:[%s437 + $0xc0] sm:$0xff] %v462
                  %v464 = vld [vmem:[%s436 + $0x208] sm:$0xff]
                  %465 = vst [vmem:[%s437 + $0xd0] sm:$0xff] %v464
                  %v466 = vld [vmem:[%s436 + $0x230] sm:$0xff]
                  %467 = vst [vmem:[%s437 + $0xe0] sm:$0xff] %v466
                  %v468 = vld [vmem:[%s436 + $0x258] sm:$0xff]
                  %469 = vst [vmem:[%s437 + $0xf0] sm:$0xff] %v468
                  %s470 = sadd.s32 1, %s435
                  %p471 = scmp.ge.s32.totalorder %s470, %s419
                  %s472 = scalar_select %p471, 0, %s470
                  %s473 = smul.u32 %s472, 8
                  %s474 = smul.u32 %s472, 8
                  %s475 = scalar_lea.vmem %s423, %s473
                  %s476 = scalar_lea.vmem %s426, %s474 [#allocation3]
                $region71: #{tpu_custom_call.1} parent=58 // loop_footer
                  %s432 = sadd.s32 %s430, 1
                $region72: #{tpu_custom_call.1} parent=58 // loop_footer_branch
                  %429 = sbr.rel target = $region68
                $region73: #{tpu_custom_call.1} parent=58 // loop_exit
                  _
              $region59: #{tpu_custom_call.1} parent=43 // pred_fallthru
                _
              %p477 = pneg %p266
              // Predicated region
              $region74: #{tpu_custom_call.1} parent=43 // pred_check
                _
              $region75: #{tpu_custom_call.1} parent=43 // pred_check_branch
                %479 = sbr.rel (%p266) target = $region77
              $region76: #{tpu_custom_call.1} parent=43 // pred_region
                %s480 = sand.u32 %s212, 7
                %s481 = ssub.s32 %s212, %s480
                %s482 = scalar_lea.vmem %s211, %s481
                %s483 = ssub.s32 %s212, %s480
                %s484 = scalar_lea.vmem %s201, %s483 [#allocation3]
                %s485 = sshrl.u32 %s212, 3
                %s486 = sshrl.u32 %s485, 2
                // While loop
                $region78: #{tpu_custom_call.1} parent=76 // loop_pre_header
                  _
                $region79: #{tpu_custom_call.1} parent=76 // loop_header
                  %s490 = sphi 0, %s492
                  %p491 = scmp.ge.s32.totalorder %s490, %s486
                  %s495 = sphi 0, %s628
                  %s496 = sphi %s211, %s631
                  %s497 = sphi %s201, %s632
                $region80: #{tpu_custom_call.1} parent=76 // loop_header_branch
                  %494 = sbr.rel (%p491) target = $region84
                $region81: #{tpu_custom_call.1} parent=76 // loop_body
                  %v498 = vld [vmem:[%s496] sm:$0xff]
                  %499 = vst [vmem:[%s497] sm:$0xff] %v498
                  %v500 = vld [vmem:[%s496 + $0x8] sm:$0xff]
                  %501 = vst [vmem:[%s497 + $0x8] sm:$0xff] %v500
                  %v502 = vld [vmem:[%s496 + $0x10] sm:$0xff]
                  %503 = vst [vmem:[%s497 + $0x10] sm:$0xff] %v502
                  %v504 = vld [vmem:[%s496 + $0x18] sm:$0xff]
                  %505 = vst [vmem:[%s497 + $0x18] sm:$0xff] %v504
                  %v506 = vld [vmem:[%s496 + $0x28] sm:$0xff]
                  %507 = vst [vmem:[%s497 + $0x10] sm:$0xff] %v506
                  %v508 = vld [vmem:[%s496 + $0x30] sm:$0xff]
                  %509 = vst [vmem:[%s497 + $0x18] sm:$0xff] %v508
                  %v510 = vld [vmem:[%s496 + $0x38] sm:$0xff]
                  %511 = vst [vmem:[%s497 + $0x20] sm:$0xff] %v510
                  %v512 = vld [vmem:[%s496 + $0x40] sm:$0xff]
                  %513 = vst [vmem:[%s497 + $0x28] sm:$0xff] %v512
                  %v514 = vld [vmem:[%s496 + $0x50] sm:$0xff]
                  %515 = vst [vmem:[%s497 + $0x20] sm:$0xff] %v514
                  %v516 = vld [vmem:[%s496 + $0x58] sm:$0xff]
                  %517 = vst [vmem:[%s497 + $0x28] sm:$0xff] %v516
                  %v518 = vld [vmem:[%s496 + $0x60] sm:$0xff]
                  %519 = vst [vmem:[%s497 + $0x30] sm:$0xff] %v518
                  %v520 = vld [vmem:[%s496 + $0x68] sm:$0xff]
                  %521 = vst [vmem:[%s497 + $0x38] sm:$0xff] %v520
                  %v522 = vld [vmem:[%s496 + $0x78] sm:$0xff]
                  %523 = vst [vmem:[%s497 + $0x30] sm:$0xff] %v522
                  %v524 = vld [vmem:[%s496 + $0x80] sm:$0xff]
                  %525 = vst [vmem:[%s497 + $0x38] sm:$0xff] %v524
                  %v526 = vld [vmem:[%s496 + $0x88] sm:$0xff]
                  %527 = vst [vmem:[%s497 + $0x40] sm:$0xff] %v526
                  %v528 = vld [vmem:[%s496 + $0x90] sm:$0xff]
                  %529 = vst [vmem:[%s497 + $0x48] sm:$0xff] %v528
                  %v530 = vld [vmem:[%s496 + $0xa0] sm:$0xff]
                  %531 = vst [vmem:[%s497 + $0x40] sm:$0xff] %v530
                  %v532 = vld [vmem:[%s496 + $0xa8] sm:$0xff]
                  %533 = vst [vmem:[%s497 + $0x48] sm:$0xff] %v532
                  %v534 = vld [vmem:[%s496 + $0xb0] sm:$0xff]
                  %535 = vst [vmem:[%s497 + $0x50] sm:$0xff] %v534
                  %v536 = vld [vmem:[%s496 + $0xb8] sm:$0xff]
                  %537 = vst [vmem:[%s497 + $0x58] sm:$0xff] %v536
                  %v538 = vld [vmem:[%s496 + $0xc8] sm:$0xff]
                  %539 = vst [vmem:[%s497 + $0x50] sm:$0xff] %v538
                  %v540 = vld [vmem:[%s496 + $0xd0] sm:$0xff]
                  %541 = vst [vmem:[%s497 + $0x58] sm:$0xff] %v540
                  %v542 = vld [vmem:[%s496 + $0xd8] sm:$0xff]
                  %543 = vst [vmem:[%s497 + $0x60] sm:$0xff] %v542
                  %v544 = vld [vmem:[%s496 + $0xe0] sm:$0xff]
                  %545 = vst [vmem:[%s497 + $0x68] sm:$0xff] %v544
                  %v546 = vld [vmem:[%s496 + $0xf0] sm:$0xff]
                  %547 = vst [vmem:[%s497 + $0x60] sm:$0xff] %v546
                  %v548 = vld [vmem:[%s496 + $0xf8] sm:$0xff]
                  %549 = vst [vmem:[%s497 + $0x68] sm:$0xff] %v548
                  %v550 = vld [vmem:[%s496 + $0x100] sm:$0xff]
                  %551 = vst [vmem:[%s497 + $0x70] sm:$0xff] %v550
                  %v552 = vld [vmem:[%s496 + $0x108] sm:$0xff]
                  %553 = vst [vmem:[%s497 + $0x78] sm:$0xff] %v552
                  %v554 = vld [vmem:[%s496 + $0x118] sm:$0xff]
                  %555 = vst [vmem:[%s497 + $0x70] sm:$0xff] %v554
                  %v556 = vld [vmem:[%s496 + $0x120] sm:$0xff]
                  %557 = vst [vmem:[%s497 + $0x78] sm:$0xff] %v556
                  %v558 = vld [vmem:[%s496 + $0x128] sm:$0xff]
                  %559 = vst [vmem:[%s497 + $0x80] sm:$0xff] %v558
                  %v560 = vld [vmem:[%s496 + $0x130] sm:$0xff]
                  %561 = vst [vmem:[%s497 + $0x88] sm:$0xff] %v560
                  %v562 = vld [vmem:[%s496 + $0x140] sm:$0xff]
                  %563 = vst [vmem:[%s497 + $0x80] sm:$0xff] %v562
                  %v564 = vld [vmem:[%s496 + $0x148] sm:$0xff]
                  %565 = vst [vmem:[%s497 + $0x88] sm:$0xff] %v564
                  %v566 = vld [vmem:[%s496 + $0x150] sm:$0xff]
                  %567 = vst [vmem:[%s497 + $0x90] sm:$0xff] %v566
                  %v568 = vld [vmem:[%s496 + $0x158] sm:$0xff]
                  %569 = vst [vmem:[%s497 + $0x98] sm:$0xff] %v568
                  %v570 = vld [vmem:[%s496 + $0x168] sm:$0xff]
                  %571 = vst [vmem:[%s497 + $0x90] sm:$0xff] %v570
                  %v572 = vld [vmem:[%s496 + $0x170] sm:$0xff]
                  %573 = vst [vmem:[%s497 + $0x98] sm:$0xff] %v572
                  %v574 = vld [vmem:[%s496 + $0x178] sm:$0xff]
                  %575 = vst [vmem:[%s497 + $0xa0] sm:$0xff] %v574
                  %v576 = vld [vmem:[%s496 + $0x180] sm:$0xff]
                  %577 = vst [vmem:[%s497 + $0xa8] sm:$0xff] %v576
                  %v578 = vld [vmem:[%s496 + $0x190] sm:$0xff]
                  %579 = vst [vmem:[%s497 + $0xa0] sm:$0xff] %v578
                  %v580 = vld [vmem:[%s496 + $0x198] sm:$0xff]
                  %581 = vst [vmem:[%s497 + $0xa8] sm:$0xff] %v580
                  %v582 = vld [vmem:[%s496 + $0x1a0] sm:$0xff]
                  %583 = vst [vmem:[%s497 + $0xb0] sm:$0xff] %v582
                  %v584 = vld [vmem:[%s496 + $0x1a8] sm:$0xff]
                  %585 = vst [vmem:[%s497 + $0xb8] sm:$0xff] %v584
                  %v586 = vld [vmem:[%s496 + $0x1b8] sm:$0xff]
                  %587 = vst [vmem:[%s497 + $0xb0] sm:$0xff] %v586
                  %v588 = vld [vmem:[%s496 + $0x1c0] sm:$0xff]
                  %589 = vst [vmem:[%s497 + $0xb8] sm:$0xff] %v588
                  %v590 = vld [vmem:[%s496 + $0x1c8] sm:$0xff]
                  %591 = vst [vmem:[%s497 + $0xc0] sm:$0xff] %v590
                  %v592 = vld [vmem:[%s496 + $0x1d0] sm:$0xff]
                  %593 = vst [vmem:[%s497 + $0xc8] sm:$0xff] %v592
                  %v594 = vld [vmem:[%s496 + $0x1e0] sm:$0xff]
                  %595 = vst [vmem:[%s497 + $0xc0] sm:$0xff] %v594
                  %v596 = vld [vmem:[%s496 + $0x1e8] sm:$0xff]
                  %597 = vst [vmem:[%s497 + $0xc8] sm:$0xff] %v596
                  %v598 = vld [vmem:[%s496 + $0x1f0] sm:$0xff]
                  %599 = vst [vmem:[%s497 + $0xd0] sm:$0xff] %v598
                  %v600 = vld [vmem:[%s496 + $0x1f8] sm:$0xff]
                  %601 = vst [vmem:[%s497 + $0xd8] sm:$0xff] %v600
                  %v602 = vld [vmem:[%s496 + $0x208] sm:$0xff]
                  %603 = vst [vmem:[%s497 + $0xd0] sm:$0xff] %v602
                  %v604 = vld [vmem:[%s496 + $0x210] sm:$0xff]
                  %605 = vst [vmem:[%s497 + $0xd8] sm:$0xff] %v604
                  %v606 = vld [vmem:[%s496 + $0x218] sm:$0xff]
                  %607 = vst [vmem:[%s497 + $0xe0] sm:$0xff] %v606
                  %v608 = vld [vmem:[%s496 + $0x220] sm:$0xff]
                  %609 = vst [vmem:[%s497 + $0xe8] sm:$0xff] %v608
                  %v610 = vld [vmem:[%s496 + $0x230] sm:$0xff]
                  %611 = vst [vmem:[%s497 + $0xe0] sm:$0xff] %v610
                  %v612 = vld [vmem:[%s496 + $0x238] sm:$0xff]
                  %613 = vst [vmem:[%s497 + $0xe8] sm:$0xff] %v612
                  %v614 = vld [vmem:[%s496 + $0x240] sm:$0xff]
                  %615 = vst [vmem:[%s497 + $0xf0] sm:$0xff] %v614
                  %v616 = vld [vmem:[%s496 + $0x248] sm:$0xff]
                  %617 = vst [vmem:[%s497 + $0xf8] sm:$0xff] %v616
                  %v618 = vld [vmem:[%s496 + $0x258] sm:$0xff]
                  %619 = vst [vmem:[%s497 + $0xf0] sm:$0xff] %v618
                  %v620 = vld [vmem:[%s496 + $0x260] sm:$0xff]
                  %621 = vst [vmem:[%s497 + $0xf8] sm:$0xff] %v620
                  %v622 = vld [vmem:[%s496 + $0x268] sm:$0xff]
                  %623 = vst [vmem:[%s497 + $0x100] sm:$0xff] %v622
                  %v624 = vld [vmem:[%s496 + $0x270] sm:$0xff]
                  %625 = vst [vmem:[%s497 + $0x108] sm:$0xff] %v624
                  %s626 = sadd.s32 1, %s495
                  %p627 = scmp.ge.s32.totalorder %s626, %s486
                  %s628 = scalar_select %p627, 0, %s626
                  %s629 = smul.u32 %s628, 32
                  %s630 = smul.u32 %s628, 32
                  %s631 = scalar_lea.vmem %s211, %s629
                  %s632 = scalar_lea.vmem %s201, %s630 [#allocation3]
                $region82: #{tpu_custom_call.1} parent=76 // loop_footer
                  %s492 = sadd.s32 %s490, 1
                $region83: #{tpu_custom_call.1} parent=76 // loop_footer_branch
                  %489 = sbr.rel target = $region79
                $region84: #{tpu_custom_call.1} parent=76 // loop_exit
                  _
                %s633 = sshrl.u32 %s485, 2
                %s634 = sand.u32 %s485, 3
                %s635 = smul.u32 %s633, 4
                %s636 = smul.u32 128, %s635
                %s637 = sshra.s32 %s636, 4
                %s638 = scalar_lea.vmem %s211, %s637
                %s639 = smul.u32 128, %s635
                %s640 = sshra.s32 %s639, 4
                %s641 = scalar_lea.vmem %s201, %s640 [#allocation3]
                // While loop
                $region85: #{tpu_custom_call.1} parent=76 // loop_pre_header
                  _
                $region86: #{tpu_custom_call.1} parent=76 // loop_header
                  %s645 = sphi 0, %s647
                  %p646 = scmp.ge.s32.totalorder %s645, %s634
                  %s650 = sphi 0, %s687
                  %s651 = sphi %s638, %s690
                  %s652 = sphi %s641, %s691
                $region87: #{tpu_custom_call.1} parent=76 // loop_header_branch
                  %649 = sbr.rel (%p646) target = $region91
                $region88: #{tpu_custom_call.1} parent=76 // loop_body
                  %v653 = vld [vmem:[%s651] sm:$0xff]
                  %654 = vst [vmem:[%s652] sm:$0xff] %v653
                  %v655 = vld [vmem:[%s651 + $0x28] sm:$0xff]
                  %656 = vst [vmem:[%s652 + $0x10] sm:$0xff] %v655
                  %v657 = vld [vmem:[%s651 + $0x50] sm:$0xff]
                  %658 = vst [vmem:[%s652 + $0x20] sm:$0xff] %v657
                  %v659 = vld [vmem:[%s651 + $0x78] sm:$0xff]
                  %660 = vst [vmem:[%s652 + $0x30] sm:$0xff] %v659
                  %v661 = vld [vmem:[%s651 + $0xa0] sm:$0xff]
                  %662 = vst [vmem:[%s652 + $0x40] sm:$0xff] %v661
                  %v663 = vld [vmem:[%s651 + $0xc8] sm:$0xff]
                  %664 = vst [vmem:[%s652 + $0x50] sm:$0xff] %v663
                  %v665 = vld [vmem:[%s651 + $0xf0] sm:$0xff]
                  %666 = vst [vmem:[%s652 + $0x60] sm:$0xff] %v665
                  %v667 = vld [vmem:[%s651 + $0x118] sm:$0xff]
                  %668 = vst [vmem:[%s652 + $0x70] sm:$0xff] %v667
                  %v669 = vld [vmem:[%s651 + $0x140] sm:$0xff]
                  %670 = vst [vmem:[%s652 + $0x80] sm:$0xff] %v669
                  %v671 = vld [vmem:[%s651 + $0x168] sm:$0xff]
                  %672 = vst [vmem:[%s652 + $0x90] sm:$0xff] %v671
                  %v673 = vld [vmem:[%s651 + $0x190] sm:$0xff]
                  %674 = vst [vmem:[%s652 + $0xa0] sm:$0xff] %v673
                  %v675 = vld [vmem:[%s651 + $0x1b8] sm:$0xff]
                  %676 = vst [vmem:[%s652 + $0xb0] sm:$0xff] %v675
                  %v677 = vld [vmem:[%s651 + $0x1e0] sm:$0xff]
                  %678 = vst [vmem:[%s652 + $0xc0] sm:$0xff] %v677
                  %v679 = vld [vmem:[%s651 + $0x208] sm:$0xff]
                  %680 = vst [vmem:[%s652 + $0xd0] sm:$0xff] %v679
                  %v681 = vld [vmem:[%s651 + $0x230] sm:$0xff]
                  %682 = vst [vmem:[%s652 + $0xe0] sm:$0xff] %v681
                  %v683 = vld [vmem:[%s651 + $0x258] sm:$0xff]
                  %684 = vst [vmem:[%s652 + $0xf0] sm:$0xff] %v683
                  %s685 = sadd.s32 1, %s650
                  %p686 = scmp.ge.s32.totalorder %s685, %s634
                  %s687 = scalar_select %p686, 0, %s685
                  %s688 = smul.u32 %s687, 8
                  %s689 = smul.u32 %s687, 8
                  %s690 = scalar_lea.vmem %s638, %s688
                  %s691 = scalar_lea.vmem %s641, %s689 [#allocation3]
                $region89: #{tpu_custom_call.1} parent=76 // loop_footer
                  %s647 = sadd.s32 %s645, 1
                $region90: #{tpu_custom_call.1} parent=76 // loop_footer_branch
                  %644 = sbr.rel target = $region86
                $region91: #{tpu_custom_call.1} parent=76 // loop_exit
                  _
                %s692 = sshll.u32 1, %s480
                %s693 = ssub.s32 %s692, 1
                loop: start=0, step=1, limit=1
                $region92: #{tpu_custom_call.1} parent=76 // loop_pre_header
                  _
                $region93: #{tpu_custom_call.1} parent=76 // loop_header
                  %s695 = sphi 0, %s699
                  %p696 = scmp.ge.s32.totalorder %s695, 1
                  %s700 = sphi %s482, %s482
                  %s701 = sphi %s484, %s484
                $region94: #{tpu_custom_call.1} parent=76 // loop_header_branch
                  %698 = sbr.rel (%p696) target = $region98
                $region95: #{tpu_custom_call.1} parent=76 // loop_body
                  %v702 = vld [vmem:[%s700] sm:%s693]
                  %703 = vst [vmem:[%s701] sm:%s693] %v702
                  %v704 = vld [vmem:[%s700 + $0x28] sm:%s693]
                  %705 = vst [vmem:[%s701 + $0x10] sm:%s693] %v704
                  %v706 = vld [vmem:[%s700 + $0x50] sm:%s693]
                  %707 = vst [vmem:[%s701 + $0x20] sm:%s693] %v706
                  %v708 = vld [vmem:[%s700 + $0x78] sm:%s693]
                  %709 = vst [vmem:[%s701 + $0x30] sm:%s693] %v708
                  %v710 = vld [vmem:[%s700 + $0xa0] sm:%s693]
                  %711 = vst [vmem:[%s701 + $0x40] sm:%s693] %v710
                  %v712 = vld [vmem:[%s700 + $0xc8] sm:%s693]
                  %713 = vst [vmem:[%s701 + $0x50] sm:%s693] %v712
                  %v714 = vld [vmem:[%s700 + $0xf0] sm:%s693]
                  %715 = vst [vmem:[%s701 + $0x60] sm:%s693] %v714
                  %v716 = vld [vmem:[%s700 + $0x118] sm:%s693]
                  %717 = vst [vmem:[%s701 + $0x70] sm:%s693] %v716
                  %v718 = vld [vmem:[%s700 + $0x140] sm:%s693]
                  %719 = vst [vmem:[%s701 + $0x80] sm:%s693] %v718
                  %v720 = vld [vmem:[%s700 + $0x168] sm:%s693]
                  %721 = vst [vmem:[%s701 + $0x90] sm:%s693] %v720
                  %v722 = vld [vmem:[%s700 + $0x190] sm:%s693]
                  %723 = vst [vmem:[%s701 + $0xa0] sm:%s693] %v722
                  %v724 = vld [vmem:[%s700 + $0x1b8] sm:%s693]
                  %725 = vst [vmem:[%s701 + $0xb0] sm:%s693] %v724
                  %v726 = vld [vmem:[%s700 + $0x1e0] sm:%s693]
                  %727 = vst [vmem:[%s701 + $0xc0] sm:%s693] %v726
                  %v728 = vld [vmem:[%s700 + $0x208] sm:%s693]
                  %729 = vst [vmem:[%s701 + $0xd0] sm:%s693] %v728
                  %v730 = vld [vmem:[%s700 + $0x230] sm:%s693]
                  %731 = vst [vmem:[%s701 + $0xe0] sm:%s693] %v730
                  %v732 = vld [vmem:[%s700 + $0x258] sm:%s693]
                  %733 = vst [vmem:[%s701 + $0xf0] sm:%s693] %v732
                $region96: #{tpu_custom_call.1} parent=76 // loop_footer
                  %s699 = sadd.s32 1, %s695
                $region97: #{tpu_custom_call.1} parent=76 // loop_footer_branch
                  %694 = sbr.rel target = $region93
                $region98: #{tpu_custom_call.1} parent=76 // loop_exit
                  _
              $region77: #{tpu_custom_call.1} parent=43 // pred_fallthru
                _
            $region44: #{tpu_custom_call.1} parent=39 // pred_fallthru
              _
            // Predicated region
            $region45: #{tpu_custom_call.1} parent=39 // pred_check
              %p220 = pneg %p216
            $region46: #{tpu_custom_call.1} parent=39 // pred_check_branch
              %222 = sbr.rel (%p220) target = $region48
            $region47: #{tpu_custom_call.1} parent=39 // pred_region
              %s223 = sshll.u32 1, %s212
              %s224 = ssub.s32 %s223, 1
              loop: start=0, step=1, limit=1
              $region49: #{tpu_custom_call.1} parent=47 // loop_pre_header
                _
              $region50: #{tpu_custom_call.1} parent=47 // loop_header
                %s226 = sphi 0, %s230
                %p227 = scmp.ge.s32.totalorder %s226, 1
                %s231 = sphi %s211, %s211
                %s232 = sphi %s201, %s201
              $region51: #{tpu_custom_call.1} parent=47 // loop_header_branch
                %229 = sbr.rel (%p227) target = $region55
              $region52: #{tpu_custom_call.1} parent=47 // loop_body
                %v233 = vld [vmem:[%s231] sm:%s224]
                %234 = vst [vmem:[%s232] sm:%s224] %v233
                %v235 = vld [vmem:[%s231 + $0x28] sm:%s224]
                %236 = vst [vmem:[%s232 + $0x10] sm:%s224] %v235
                %v237 = vld [vmem:[%s231 + $0x50] sm:%s224]
                %238 = vst [vmem:[%s232 + $0x20] sm:%s224] %v237
                %v239 = vld [vmem:[%s231 + $0x78] sm:%s224]
                %240 = vst [vmem:[%s232 + $0x30] sm:%s224] %v239
                %v241 = vld [vmem:[%s231 + $0xa0] sm:%s224]
                %242 = vst [vmem:[%s232 + $0x40] sm:%s224] %v241
                %v243 = vld [vmem:[%s231 + $0xc8] sm:%s224]
                %244 = vst [vmem:[%s232 + $0x50] sm:%s224] %v243
                %v245 = vld [vmem:[%s231 + $0xf0] sm:%s224]
                %246 = vst [vmem:[%s232 + $0x60] sm:%s224] %v245
                %v247 = vld [vmem:[%s231 + $0x118] sm:%s224]
                %248 = vst [vmem:[%s232 + $0x70] sm:%s224] %v247
                %v249 = vld [vmem:[%s231 + $0x140] sm:%s224]
                %250 = vst [vmem:[%s232 + $0x80] sm:%s224] %v249
                %v251 = vld [vmem:[%s231 + $0x168] sm:%s224]
                %252 = vst [vmem:[%s232 + $0x90] sm:%s224] %v251
                %v253 = vld [vmem:[%s231 + $0x190] sm:%s224]
                %254 = vst [vmem:[%s232 + $0xa0] sm:%s224] %v253
                %v255 = vld [vmem:[%s231 + $0x1b8] sm:%s224]
                %256 = vst [vmem:[%s232 + $0xb0] sm:%s224] %v255
                %v257 = vld [vmem:[%s231 + $0x1e0] sm:%s224]
                %258 = vst [vmem:[%s232 + $0xc0] sm:%s224] %v257
                %v259 = vld [vmem:[%s231 + $0x208] sm:%s224]
                %260 = vst [vmem:[%s232 + $0xd0] sm:%s224] %v259
                %v261 = vld [vmem:[%s231 + $0x230] sm:%s224]
                %262 = vst [vmem:[%s232 + $0xe0] sm:%s224] %v261
                %v263 = vld [vmem:[%s231 + $0x258] sm:%s224]
                %264 = vst [vmem:[%s232 + $0xf0] sm:%s224] %v263
              $region53: #{tpu_custom_call.1} parent=47 // loop_footer
                %s230 = sadd.s32 1, %s226
              $region54: #{tpu_custom_call.1} parent=47 // loop_footer_branch
                %225 = sbr.rel target = $region50
              $region55: #{tpu_custom_call.1} parent=47 // loop_exit
                _
            $region48: #{tpu_custom_call.1} parent=39 // pred_fallthru
              _
          $region40: #{tpu_custom_call.1} parent=35 // pred_fallthru
            _
          %734 = vnop
        $region36: #{tpu_custom_call.1} parent=31 // pred_fallthru
          _
      $region32: #{tpu_custom_call.1} parent=5 // pred_fallthru
        _
      %p735 = scmp.le.s32.totalorder 1, %s14
      %p736 = scmp.lt.s32.totalorder %s14, 7
      %p737 = pnand %p735, %p736
      %p738 = pneg %p737
      // Predicated region
      $region99: #{tpu_custom_call.1} parent=5 // pred_check
        _
      $region100: #{tpu_custom_call.1} parent=5 // pred_check_branch
        %740 = sbr.rel (%p737) target = $region102
      $region101: #{tpu_custom_call.1} parent=5 // pred_region
        %s741 = ssub.s32 %s14, 1
        %s742 = sand.u32 %s41, 1
        %s743 = sand.u32 %s41, 1
        %s744 = smul.addr %s743, 256
        %s745 = scalar_lea.vmem [#allocation3], %s744
        // Predicated region
        $region103: #{tpu_custom_call.1} parent=101 // pred_check
          %p746 = pneg %p54
        $region104: #{tpu_custom_call.1} parent=101 // pred_check_branch
          %748 = sbr.rel (%p746) target = $region106
        $region105: #{tpu_custom_call.1} parent=101 // pred_region
          _
        $region106: #{tpu_custom_call.1} parent=101 // pred_fallthru
          _
        %s749 = sand.u32 %s41, 1
        %s750 = sand.u32 %s41, 1
        %s751 = smul.addr %s750, 256
        %s752 = scalar_lea.vmem [#allocation3], %s751
        %p753 = pneg %p54
        %p754 = pneg %p51
        %p755 = pneg %p75
        %p756 = pneg %p72
        %p757 = pneg %p96
        %p758 = pneg %p93
        %p759 = pneg %p117
        %p760 = pneg %p114
        %p761 = pneg %p138
        %p762 = pneg %p135
        %p763 = pneg %p164
        %p764 = pneg %p161
        %s765 = sand.u32 %s151, 1
        %s766 = scalar_lea.sflag [#allocation5], %s765
        %s767 = sand.u32 %s151, 1
        %s768 = scalar_lea.vmem [#allocation4], %s767
        %s769 = smul.u32 2, %s24
        %s770 = ssub.s32 5, %s769
        %p771 = scmp.lt.s32.totalorder %s770, 2
        %s772 = scalar_select %p771, %s770, 2
        %s773 = smul.u32 2048, %s772
        %p774 = scmp.eq.s32.totalorder %s24, 0
        // Predicated region
        $region107: #{tpu_custom_call.1} parent=101 // pred_check
          %p775 = pneg %p774
        $region108: #{tpu_custom_call.1} parent=101 // pred_check_branch
          %777 = sbr.rel (%p775) target = $region110
        $region109: #{tpu_custom_call.1} parent=101 // pred_region
          %778 = vst [vmem:[#allocation2] sm:$0xff] -inf
          %779 = vst [vmem:[#allocation2 + $0x8] sm:$0xff] -inf
          %780 = vst [vmem:[#allocation2 + $0x10] sm:$0xff] -inf
          %781 = vst [vmem:[#allocation2 + $0x18] sm:$0xff] -inf
          %782 = vst [vmem:[#allocation2 + $0x20] sm:$0xff] -inf
          %783 = vst [vmem:[#allocation2 + $0x28] sm:$0xff] -inf
          %784 = vst [vmem:[#allocation2 + $0x30] sm:$0xff] -inf
          %785 = vst [vmem:[#allocation2 + $0x38] sm:$0xff] -inf
          %786 = vst [vmem:[#allocation2 + $0x40] sm:$0xff] -inf
          %787 = vst [vmem:[#allocation2 + $0x48] sm:$0xff] -inf
          %788 = vst [vmem:[#allocation2 + $0x50] sm:$0xff] -inf
          %789 = vst [vmem:[#allocation2 + $0x58] sm:$0xff] -inf
          %790 = vst [vmem:[#allocation2 + $0x60] sm:$0xff] -inf
          %791 = vst [vmem:[#allocation2 + $0x68] sm:$0xff] -inf
          %792 = vst [vmem:[#allocation2 + $0x70] sm:$0xff] -inf
          %793 = vst [vmem:[#allocation2 + $0x78] sm:$0xff] -inf
        $region110: #{tpu_custom_call.1} parent=101 // pred_fallthru
          _
        %v794 = vlaneseq
        %v795 = vand.u32 %v794, 127
        %s796 = smul.u32 %s24, 256
        %v797 = vld [vmem:[#allocation2] sm:$0xff]
        %v798 = vld [vmem:[#allocation2 + $0x8] sm:$0xff]
        %v799 = vld [vmem:[#allocation2 + $0x10] sm:$0xff]
        %v800 = vld [vmem:[#allocation2 + $0x18] sm:$0xff]
        %v801 = vld [vmem:[#allocation2 + $0x20] sm:$0xff]
        %v802 = vld [vmem:[#allocation2 + $0x28] sm:$0xff]
        %v803 = vld [vmem:[#allocation2 + $0x30] sm:$0xff]
        %v804 = vld [vmem:[#allocation2 + $0x38] sm:$0xff]
        %v805 = vld [vmem:[#allocation2 + $0x40] sm:$0xff]
        %v806 = vld [vmem:[#allocation2 + $0x48] sm:$0xff]
        %v807 = vld [vmem:[#allocation2 + $0x50] sm:$0xff]
        %v808 = vld [vmem:[#allocation2 + $0x58] sm:$0xff]
        %v809 = vld [vmem:[#allocation2 + $0x60] sm:$0xff]
        %v810 = vld [vmem:[#allocation2 + $0x68] sm:$0xff]
        %v811 = vld [vmem:[#allocation2 + $0x70] sm:$0xff]
        %v812 = vld [vmem:[#allocation2 + $0x78] sm:$0xff]
        %v813 = vld [vmem:[%s745] sm:$0xff]
        %v814 = vld [vmem:[%s745 + $0x10] sm:$0xff]
        %v815 = vld [vmem:[%s745 + $0x20] sm:$0xff]
        %v816 = vld [vmem:[%s745 + $0x30] sm:$0xff]
        %v817 = vld [vmem:[%s745 + $0x40] sm:$0xff]
        %v818 = vld [vmem:[%s745 + $0x50] sm:$0xff]
        %v819 = vld [vmem:[%s745 + $0x60] sm:$0xff]
        %v820 = vld [vmem:[%s745 + $0x70] sm:$0xff]
        %v821 = vld [vmem:[%s745 + $0x80] sm:$0xff]
        %v822 = vld [vmem:[%s745 + $0x90] sm:$0xff]
        %v823 = vld [vmem:[%s745 + $0xa0] sm:$0xff]
        %v824 = vld [vmem:[%s745 + $0xb0] sm:$0xff]
        %v825 = vld [vmem:[%s745 + $0xc0] sm:$0xff]
        %v826 = vld [vmem:[%s745 + $0xd0] sm:$0xff]
        %v827 = vld [vmem:[%s745 + $0xe0] sm:$0xff]
        %v828 = vld [vmem:[%s745 + $0xf0] sm:$0xff]
        %v829 = vstv %s796
        %v830 = vadd.s32 %v829, %v795
        %vm831 = vcmp.lt.s32.totalorder %v830, 576
        %v832 = vsel %vm831, %v813, -inf
        %v833 = vsel %vm831, %v814, -inf
        %v834 = vsel %vm831, %v815, -inf
        %v835 = vsel %vm831, %v816, -inf
        %v836 = vsel %vm831, %v817, -inf
        %v837 = vsel %vm831, %v818, -inf
        %v838 = vsel %vm831, %v819, -inf
        %v839 = vsel %vm831, %v820, -inf
        %v840 = vsel %vm831, %v821, -inf
        %v841 = vsel %vm831, %v822, -inf
        %v842 = vsel %vm831, %v823, -inf
        %v843 = vsel %vm831, %v824, -inf
        %v844 = vsel %vm831, %v825, -inf
        %v845 = vsel %vm831, %v826, -inf
        %v846 = vsel %vm831, %v827, -inf
        %v847 = vsel %vm831, %v828, -inf
        %v848 = vmax.f32 %v797, %v832
        %v849 = vmax.f32 %v798, %v833
        %v850 = vmax.f32 %v799, %v834
        %v851 = vmax.f32 %v800, %v835
        %v852 = vmax.f32 %v801, %v836
        %v853 = vmax.f32 %v802, %v837
        %v854 = vmax.f32 %v803, %v838
        %v855 = vmax.f32 %v804, %v839
        %v856 = vmax.f32 %v805, %v840
        %v857 = vmax.f32 %v806, %v841
        %v858 = vmax.f32 %v807, %v842
        %v859 = vmax.f32 %v808, %v843
        %v860 = vmax.f32 %v809, %v844
        %v861 = vmax.f32 %v810, %v845
        %v862 = vmax.f32 %v811, %v846
        %v863 = vmax.f32 %v812, %v847
        %v864 = vld [vmem:[%s745 + $0x8] sm:$0xff]
        %v865 = vld [vmem:[%s745 + $0x18] sm:$0xff]
        %v866 = vld [vmem:[%s745 + $0x28] sm:$0xff]
        %v867 = vld [vmem:[%s745 + $0x38] sm:$0xff]
        %v868 = vld [vmem:[%s745 + $0x48] sm:$0xff]
        %v869 = vld [vmem:[%s745 + $0x58] sm:$0xff]
        %v870 = vld [vmem:[%s745 + $0x68] sm:$0xff]
        %v871 = vld [vmem:[%s745 + $0x78] sm:$0xff]
        %v872 = vld [vmem:[%s745 + $0x88] sm:$0xff]
        %v873 = vld [vmem:[%s745 + $0x98] sm:$0xff]
        %v874 = vld [vmem:[%s745 + $0xa8] sm:$0xff]
        %v875 = vld [vmem:[%s745 + $0xb8] sm:$0xff]
        %v876 = vld [vmem:[%s745 + $0xc8] sm:$0xff]
        %v877 = vld [vmem:[%s745 + $0xd8] sm:$0xff]
        %v878 = vld [vmem:[%s745 + $0xe8] sm:$0xff]
        %v879 = vld [vmem:[%s745 + $0xf8] sm:$0xff]
        %s880 = sadd.s32 %s796, 128
        %v881 = vstv %s880
        %v882 = vadd.s32 %v881, %v795
        %vm883 = vcmp.lt.s32.totalorder %v882, 576
        %v884 = vsel %vm883, %v864, -inf
        %v885 = vsel %vm883, %v865, -inf
        %v886 = vsel %vm883, %v866, -inf
        %v887 = vsel %vm883, %v867, -inf
        %v888 = vsel %vm883, %v868, -inf
        %v889 = vsel %vm883, %v869, -inf
        %v890 = vsel %vm883, %v870, -inf
        %v891 = vsel %vm883, %v871, -inf
        %v892 = vsel %vm883, %v872, -inf
        %v893 = vsel %vm883, %v873, -inf
        %v894 = vsel %vm883, %v874, -inf
        %v895 = vsel %vm883, %v875, -inf
        %v896 = vsel %vm883, %v876, -inf
        %v897 = vsel %vm883, %v877, -inf
        %v898 = vsel %vm883, %v878, -inf
        %v899 = vsel %vm883, %v879, -inf
        %v900 = vmax.f32 %v848, %v884
        %v901 = vmax.f32 %v849, %v885
        %v902 = vmax.f32 %v850, %v886
        %v903 = vmax.f32 %v851, %v887
        %v904 = vmax.f32 %v852, %v888
        %v905 = vmax.f32 %v853, %v889
        %v906 = vmax.f32 %v854, %v890
        %v907 = vmax.f32 %v855, %v891
        %v908 = vmax.f32 %v856, %v892
        %v909 = vmax.f32 %v857, %v893
        %v910 = vmax.f32 %v858, %v894
        %v911 = vmax.f32 %v859, %v895
        %v912 = vmax.f32 %v860, %v896
        %v913 = vmax.f32 %v861, %v897
        %v914 = vmax.f32 %v862, %v898
        %v915 = vmax.f32 %v863, %v899
        %916 = vst [vmem:[#allocation2] sm:$0xff] %v900
        %917 = vst [vmem:[#allocation2 + $0x8] sm:$0xff] %v901
        %918 = vst [vmem:[#allocation2 + $0x10] sm:$0xff] %v902
        %919 = vst [vmem:[#allocation2 + $0x18] sm:$0xff] %v903
        %920 = vst [vmem:[#allocation2 + $0x20] sm:$0xff] %v904
        %921 = vst [vmem:[#allocation2 + $0x28] sm:$0xff] %v905
        %922 = vst [vmem:[#allocation2 + $0x30] sm:$0xff] %v906
        %923 = vst [vmem:[#allocation2 + $0x38] sm:$0xff] %v907
        %924 = vst [vmem:[#allocation2 + $0x40] sm:$0xff] %v908
        %925 = vst [vmem:[#allocation2 + $0x48] sm:$0xff] %v909
        %926 = vst [vmem:[#allocation2 + $0x50] sm:$0xff] %v910
        %927 = vst [vmem:[#allocation2 + $0x58] sm:$0xff] %v911
        %928 = vst [vmem:[#allocation2 + $0x60] sm:$0xff] %v912
        %929 = vst [vmem:[#allocation2 + $0x68] sm:$0xff] %v913
        %930 = vst [vmem:[#allocation2 + $0x70] sm:$0xff] %v914
        %931 = vst [vmem:[#allocation2 + $0x78] sm:$0xff] %v915
        %p932 = scmp.eq.s32.totalorder %s24, 2
        // Predicated region
        $region111: #{tpu_custom_call.1} parent=101 // pred_check
          %p933 = pneg %p932
        $region112: #{tpu_custom_call.1} parent=101 // pred_check_branch
          %935 = sbr.rel (%p933) target = $region114
        $region113: #{tpu_custom_call.1} parent=101 // pred_region
          %v936 = vld [vmem:[#allocation2] sm:$0xff]
          %v937 = vld [vmem:[#allocation2 + $0x8] sm:$0xff]
          %v938 = vld [vmem:[#allocation2 + $0x10] sm:$0xff]
          %v939 = vld [vmem:[#allocation2 + $0x18] sm:$0xff]
          %v940 = vld [vmem:[#allocation2 + $0x20] sm:$0xff]
          %v941 = vld [vmem:[#allocation2 + $0x28] sm:$0xff]
          %v942 = vld [vmem:[#allocation2 + $0x30] sm:$0xff]
          %v943 = vld [vmem:[#allocation2 + $0x38] sm:$0xff]
          %v944 = vld [vmem:[#allocation2 + $0x40] sm:$0xff]
          %v945 = vld [vmem:[#allocation2 + $0x48] sm:$0xff]
          %v946 = vld [vmem:[#allocation2 + $0x50] sm:$0xff]
          %v947 = vld [vmem:[#allocation2 + $0x58] sm:$0xff]
          %v948 = vld [vmem:[#allocation2 + $0x60] sm:$0xff]
          %v949 = vld [vmem:[#allocation2 + $0x68] sm:$0xff]
          %v950 = vld [vmem:[#allocation2 + $0x70] sm:$0xff]
          %v951 = vld [vmem:[#allocation2 + $0x78] sm:$0xff]
          %952 = vxpose.xlu0.b32.start [1/16] %v936, 128
          %953 = vxpose.xlu0.b32.cont [2/16] %v937, 128
          %954 = vxpose.xlu0.b32.cont [3/16] %v938, 128
          %955 = vxpose.xlu0.b32.cont [4/16] %v939, 128
          %956 = vxpose.xlu0.b32.cont [5/16] %v940, 128
          %957 = vxpose.xlu0.b32.cont [6/16] %v941, 128
          %958 = vxpose.xlu0.b32.cont [7/16] %v942, 128
          %959 = vxpose.xlu0.b32.cont [8/16] %v943, 128
          %960 = vxpose.xlu0.b32.cont [9/16] %v944, 128
          %961 = vxpose.xlu0.b32.cont [10/16] %v945, 128
          %962 = vxpose.xlu0.b32.cont [11/16] %v946, 128
          %963 = vxpose.xlu0.b32.cont [12/16] %v947, 128
          %964 = vxpose.xlu0.b32.cont [13/16] %v948, 128
          %965 = vxpose.xlu0.b32.cont [14/16] %v949, 128
          %966 = vxpose.xlu0.b32.cont [15/16] %v950, 128
          %967 = vxpose.xlu0.b32.end [16/16] %v951, 128
          %v968 = vpop.trf.xlu0
          %v969 = vpop.trf.xlu0
          %v970 = vpop.trf.xlu0
          %v971 = vpop.trf.xlu0
          %v972 = vpop.trf.xlu0
          %v973 = vpop.trf.xlu0
          %v974 = vpop.trf.xlu0
          %v975 = vpop.trf.xlu0
          %v976 = vpop.trf.xlu0
          %v977 = vpop.trf.xlu0
          %v978 = vpop.trf.xlu0
          %v979 = vpop.trf.xlu0
          %v980 = vpop.trf.xlu0
          %v981 = vpop.trf.xlu0
          %v982 = vpop.trf.xlu0
          %v983 = vpop.trf.xlu0
          %v984 = vmax.f32 %v968, %v972
          %v985 = vmax.f32 %v969, %v973
          %v986 = vmax.f32 %v970, %v974
          %v987 = vmax.f32 %v971, %v975
          %v988 = vmax.f32 %v984, %v976
          %v989 = vmax.f32 %v985, %v977
          %v990 = vmax.f32 %v986, %v978
          %v991 = vmax.f32 %v987, %v979
          %v992 = vmax.f32 %v988, %v980
          %v993 = vmax.f32 %v989, %v981
          %v994 = vmax.f32 %v990, %v982
          %v995 = vmax.f32 %v991, %v983
          %v996 = vmax.f32 %v992, %v993
          %v997 = vmax.f32 %v994, %v995
          %v998 = vmax.f32 %v996, %v997
          %v999 = vrot.slane %v998, 4
          %v1000 = vmax.f32 %v998, %v999
          %v1001 = vrot.slane %v1000, 2
          %v1002 = vmax.f32 %v1000, %v1001
          %v1003 = vrot.slane %v1002, 1
          %v1004 = vmax.f32 %v1002, %v1003
          %v1005 = vld [vmem:[%s1] sm:$0xff]
          %v1006 = vld [vmem:[%s1 + $0x8] sm:$0xff]
          %v1007 = vld [vmem:[%s1 + $0x10] sm:$0xff]
          %v1008 = vld [vmem:[%s1 + $0x18] sm:$0xff]
          %v1009 = vld [vmem:[%s1 + $0x20] sm:$0xff]
          %v1010 = vld [vmem:[%s1 + $0x28] sm:$0xff]
          %v1011 = vld [vmem:[%s1 + $0x30] sm:$0xff]
          %v1012 = vld [vmem:[%s1 + $0x38] sm:$0xff]
          %v1013 = vld [vmem:[%s1 + $0x40] sm:$0xff]
          %v1014 = vld [vmem:[%s1 + $0x48] sm:$0xff]
          %v1015 = vld [vmem:[%s1 + $0x50] sm:$0xff]
          %v1016 = vld [vmem:[%s1 + $0x58] sm:$0xff]
          %v1017 = vld [vmem:[%s1 + $0x60] sm:$0xff]
          %v1018 = vld [vmem:[%s1 + $0x68] sm:$0xff]
          %v1019 = vld [vmem:[%s1 + $0x70] sm:$0xff]
          %v1020 = vld [vmem:[%s1 + $0x78] sm:$0xff]
          %v1021 = vld [vmem:[%s2] sm:$0x1]
          %1022 = vmatprep.subr.mxu0 0.0
          %1023 = vmatpush1.msra.mxu0 %v1020
          %1024 = vmatprep.subr.mxu0 0.0
          %1025 = vmatpush1.msra.mxu0 %v1019
          %1026 = vmatprep.subr.mxu0 0.0
          %1027 = vmatpush1.msra.mxu0 %v1018
          %1028 = vmatprep.subr.mxu0 0.0
          %1029 = vmatpush1.msra.mxu0 %v1017
          %1030 = vmatprep.subr.mxu0 0.0
          %1031 = vmatpush1.msra.mxu0 %v1016
          %1032 = vmatprep.subr.mxu0 0.0
          %1033 = vmatpush1.msra.mxu0 %v1015
          %1034 = vmatprep.subr.mxu0 0.0
          %1035 = vmatpush1.msra.mxu0 %v1014
          %1036 = vmatprep.subr.mxu0 0.0
          %1037 = vmatpush1.msra.mxu0 %v1013
          %1038 = vmatprep.subr.mxu0 0.0
          %1039 = vmatpush1.msra.mxu0 %v1012
          %1040 = vmatprep.subr.mxu0 0.0
          %1041 = vmatpush1.msra.mxu0 %v1011
          %1042 = vmatprep.subr.mxu0 0.0
          %1043 = vmatpush1.msra.mxu0 %v1010
          %1044 = vmatprep.subr.mxu0 0.0
          %1045 = vmatpush1.msra.mxu0 %v1009
          %1046 = vmatprep.subr.mxu0 0.0
          %1047 = vmatpush1.msra.mxu0 %v1008
          %1048 = vmatprep.subr.mxu0 0.0
          %1049 = vmatpush1.msra.mxu0 %v1007
          %1050 = vmatprep.subr.mxu0 0.0
          %1051 = vmatpush1.msra.mxu0 %v1006
          %1052 = vmatprep.subr.mxu0 0.0
          %1053 = vmatpush1.msra.mxu0 %v1005
          %1054 = vmatprep.subr.mxu0 0.0
          %1055 = vmatpush2.msra.mxu0 0.0
          %1056 = vmatprep.subr.mxu0 0.0
          %1057 = vmatpush2.msra.mxu0 0.0
          %1058 = vmatprep.subr.mxu0 0.0
          %1059 = vmatpush2.msra.mxu0 0.0
          %1060 = vmatprep.subr.mxu0 0.0
          %1061 = vmatpush2.msra.mxu0 0.0
          %1062 = vmatprep.subr.mxu0 0.0
          %1063 = vmatpush2.msra.mxu0 0.0
          %1064 = vmatprep.subr.mxu0 0.0
          %1065 = vmatpush2.msra.mxu0 0.0
          %1066 = vmatprep.subr.mxu0 0.0
          %1067 = vmatpush2.msra.mxu0 0.0
          %1068 = vmatprep.subr.mxu0 0.0
          %1069 = vmatpush2.msra.mxu0 0.0
          %1070 = vmatprep.subr.mxu0 0.0
          %1071 = vmatpush2.msra.mxu0 0.0
          %1072 = vmatprep.subr.mxu0 0.0
          %1073 = vmatpush2.msra.mxu0 0.0
          %1074 = vmatprep.subr.mxu0 0.0
          %1075 = vmatpush2.msra.mxu0 0.0
          %1076 = vmatprep.subr.mxu0 0.0
          %1077 = vmatpush2.msra.mxu0 0.0
          %1078 = vmatprep.subr.mxu0 0.0
          %1079 = vmatpush2.msra.mxu0 0.0
          %1080 = vmatprep.subr.mxu0 0.0
          %1081 = vmatpush2.msra.mxu0 0.0
          %1082 = vmatprep.subr.mxu0 0.0
          %1083 = vmatpush2.msra.mxu0 0.0
          %1084 = vmatprep.subr.mxu0 0.0
          %1085 = vmatpush2.msra.mxu0 0.0
          %1086 = vmatprep.mubr.f32.mxu0 0.0
          %1087 = vmatmul.mubr.f32.gmra.mxu0 %v1004
          %v1088 = vpop.f32.mrf.mxu0
          %v1089 = vadd.f32 %v1021, %v1088
          %v1090 = vpop.f32.mrf.mxu0
          %1091 = vdwg.mxu0
          %v1092 = vmax.f32 %v1089, 0.0
          %v1093 = vld [vmem:[%s3] sm:$0xff]
          %v1094 = vld [vmem:[%s3 + $0x8] sm:$0xff]
          %v1095 = vld [vmem:[%s3 + $0x10] sm:$0xff]
          %v1096 = vld [vmem:[%s3 + $0x18] sm:$0xff]
          %v1097 = vld [vmem:[%s3 + $0x20] sm:$0xff]
          %v1098 = vld [vmem:[%s3 + $0x28] sm:$0xff]
          %v1099 = vld [vmem:[%s3 + $0x30] sm:$0xff]
          %v1100 = vld [vmem:[%s3 + $0x38] sm:$0xff]
          %v1101 = vld [vmem:[%s3 + $0x40] sm:$0xff]
          %v1102 = vld [vmem:[%s3 + $0x48] sm:$0xff]
          %v1103 = vld [vmem:[%s3 + $0x50] sm:$0xff]
          %v1104 = vld [vmem:[%s3 + $0x58] sm:$0xff]
          %v1105 = vld [vmem:[%s3 + $0x60] sm:$0xff]
          %v1106 = vld [vmem:[%s3 + $0x68] sm:$0xff]
          %v1107 = vld [vmem:[%s3 + $0x70] sm:$0xff]
          %v1108 = vld [vmem:[%s3 + $0x78] sm:$0xff]
          %v1109 = vld [vmem:[%s4] sm:$0x1]
          %1110 = vmatprep.subr.mxu0 0.0
          %1111 = vmatpush1.msra.mxu0 %v1108
          %1112 = vmatprep.subr.mxu0 0.0
          %1113 = vmatpush1.msra.mxu0 %v1107
          %1114 = vmatprep.subr.mxu0 0.0
          %1115 = vmatpush1.msra.mxu0 %v1106
          %1116 = vmatprep.subr.mxu0 0.0
          %1117 = vmatpush1.msra.mxu0 %v1105
          %1118 = vmatprep.subr.mxu0 0.0
          %1119 = vmatpush1.msra.mxu0 %v1104
          %1120 = vmatprep.subr.mxu0 0.0
          %1121 = vmatpush1.msra.mxu0 %v1103
          %1122 = vmatprep.subr.mxu0 0.0
          %1123 = vmatpush1.msra.mxu0 %v1102
          %1124 = vmatprep.subr.mxu0 0.0
          %1125 = vmatpush1.msra.mxu0 %v1101
          %1126 = vmatprep.subr.mxu0 0.0
          %1127 = vmatpush1.msra.mxu0 %v1100
          %1128 = vmatprep.subr.mxu0 0.0
          %1129 = vmatpush1.msra.mxu0 %v1099
          %1130 = vmatprep.subr.mxu0 0.0
          %1131 = vmatpush1.msra.mxu0 %v1098
          %1132 = vmatprep.subr.mxu0 0.0
          %1133 = vmatpush1.msra.mxu0 %v1097
          %1134 = vmatprep.subr.mxu0 0.0
          %1135 = vmatpush1.msra.mxu0 %v1096
          %1136 = vmatprep.subr.mxu0 0.0
          %1137 = vmatpush1.msra.mxu0 %v1095
          %1138 = vmatprep.subr.mxu0 0.0
          %1139 = vmatpush1.msra.mxu0 %v1094
          %1140 = vmatprep.subr.mxu0 0.0
          %1141 = vmatpush1.msra.mxu0 %v1093
          %1142 = vmatprep.subr.mxu0 0.0
          %1143 = vmatpush2.msra.mxu0 0.0
          %1144 = vmatprep.subr.mxu0 0.0
          %1145 = vmatpush2.msra.mxu0 0.0
          %1146 = vmatprep.subr.mxu0 0.0
          %1147 = vmatpush2.msra.mxu0 0.0
          %1148 = vmatprep.subr.mxu0 0.0
          %1149 = vmatpush2.msra.mxu0 0.0
          %1150 = vmatprep.subr.mxu0 0.0
          %1151 = vmatpush2.msra.mxu0 0.0
          %1152 = vmatprep.subr.mxu0 0.0
          %1153 = vmatpush2.msra.mxu0 0.0
          %1154 = vmatprep.subr.mxu0 0.0
          %1155 = vmatpush2.msra.mxu0 0.0
          %1156 = vmatprep.subr.mxu0 0.0
          %1157 = vmatpush2.msra.mxu0 0.0
          %1158 = vmatprep.subr.mxu0 0.0
          %1159 = vmatpush2.msra.mxu0 0.0
          %1160 = vmatprep.subr.mxu0 0.0
          %1161 = vmatpush2.msra.mxu0 0.0
          %1162 = vmatprep.subr.mxu0 0.0
          %1163 = vmatpush2.msra.mxu0 0.0
          %1164 = vmatprep.subr.mxu0 0.0
          %1165 = vmatpush2.msra.mxu0 0.0
          %1166 = vmatprep.subr.mxu0 0.0
          %1167 = vmatpush2.msra.mxu0 0.0
          %1168 = vmatprep.subr.mxu0 0.0
          %1169 = vmatpush2.msra.mxu0 0.0
          %1170 = vmatprep.subr.mxu0 0.0
          %1171 = vmatpush2.msra.mxu0 0.0
          %1172 = vmatprep.subr.mxu0 0.0
          %1173 = vmatpush2.msra.mxu0 0.0
          %1174 = vmatprep.mubr.f32.mxu0 0.0
          %1175 = vmatmul.mubr.f32.gmra.mxu0 %v1092
          %v1176 = vpop.f32.mrf.mxu0
          %v1177 = vadd.f32 %v1109, %v1176
          %v1178 = vpop.f32.mrf.mxu0
          %1179 = vdwg.mxu0
          %vm1180 = vcmask 73728
          %1181 = vst.msk [vmem:[%s768] sm:$0x1] %vm1180, %v1177
        $region114: #{tpu_custom_call.1} parent=101 // pred_fallthru
          _
        %s1182 = sand.u32 %s151, 1
        %s1183 = scalar_lea.sflag [#allocation5], %s1182
        %s1184 = sand.u32 %s151, 1
        %s1185 = scalar_lea.vmem [#allocation4], %s1184
        // Predicated region
        $region115: #{tpu_custom_call.1} parent=101 // pred_check
          %p1186 = pneg %p161
        $region116: #{tpu_custom_call.1} parent=101 // pred_check_branch
          %1188 = sbr.rel (%p1186) target = $region118
        $region117: #{tpu_custom_call.1} parent=101 // pred_region
          %s1190 = ssub.s32 16, 16
          %1191 = vsyncadd %s1183, %s1190
          %s1192 = smul.addr %s23, 16
          %s1193 = scalar_lea.hbm %s5, %s1192
          %s1195 = sshll.u32 %s1185, 4
          %s1196 = int_to_ptr.vmem [resolvable:$true] %s1195
          %1198 = dma.vmem_to_hbm [thread:$0]  %s1196, 16, %s1193, %s1183
        $region118: #{tpu_custom_call.1} parent=101 // pred_fallthru
          _
      $region102: #{tpu_custom_call.1} parent=5 // pred_fallthru
        _
      %p1199 = scmp.le.s32.totalorder 2, %s14
      // Predicated region
      $region119: #{tpu_custom_call.1} parent=5 // pred_check
        %p1200 = pneg %p1199
      $region120: #{tpu_custom_call.1} parent=5 // pred_check_branch
        %1202 = sbr.rel (%p1200) target = $region122
      $region121: #{tpu_custom_call.1} parent=5 // pred_region
        %s1203 = ssub.s32 %s14, 2
        // Predicated region
        $region123: #{tpu_custom_call.1} parent=121 // pred_check
          %p1204 = pneg %p167
        $region124: #{tpu_custom_call.1} parent=121 // pred_check_branch
          %1206 = sbr.rel (%p1204) target = $region126
        $region125: #{tpu_custom_call.1} parent=121 // pred_region
          %s1207 = sand.u32 %s152, 1
          %s1208 = scalar_lea.sflag [#allocation5], %s1207
          %s1209 = sand.u32 %s152, 1
          %s1210 = scalar_lea.vmem [#allocation4], %s1209
          %1211 = dma.done %s1208, 16
        $region126: #{tpu_custom_call.1} parent=121 // pred_fallthru
          _
      $region122: #{tpu_custom_call.1} parent=5 // pred_fallthru
        _
    $region6: #{tpu_custom_call.1} parent=1 // loop_footer
      %s18 = sadd.s32 1, %s14
    $region7: #{tpu_custom_call.1} parent=1 // loop_footer_branch
      %13 = sbr.rel target = $region3
    $region8: #{tpu_custom_call.1} parent=1 // loop_exit
      _
    %1212 = vsyncpa [#allocation5], 1
    %s1213 = scalar_lea.sflag [#allocation5], 1
    %1214 = vsyncpa %s1213, 1

</llo_original>
